<compile_context>
chip_gen: v7x
topology: tpu7x:2x2x1
jax: 0.10.0
libtpu: 0.0.40
codegen_flags: <defaults>
</compile_context>

<pallas_src>
import functools

import jax
import jax.numpy as jnp
from jax.experimental import pallas as pl
from jax.experimental.pallas import tpu as pltpu

DATA_DIM = 1 * 32 * 32      # 1024
HIDDEN_DIM = 512
ETA = 1e-6                  # Constants.eta in the bivae codebase
COMPUTE_DTYPE = jnp.bfloat16
MAX_TB = 512                # batch-tile upper bound (sweepable 512-1024)


def _round_up(n, m):
    return ((n + m - 1) // m) * m


# -----------------------------------------------------------------------------
# Kernel
# -----------------------------------------------------------------------------
def _enc_kernel(x_ref, w1_ref, b1_ref, wh_ref, bh_ref, out_ref, *, latent_dim):
    # x_ref : (TB, 1024) f32          w1_ref: (1024, 512) bf16   b1_ref: (1, 512) f32
    # wh_ref: (512, OUT_PAD) bf16     bh_ref: (1, OUT_PAD) f32   out_ref: (TB, OUT_PAD) f32
    x = x_ref[...].astype(w1_ref.dtype)                                  # in-kernel f32->bf16 cast
    h = jnp.dot(x, w1_ref[...], preferred_element_type=jnp.float32)     # (TB, 512) f32
    h = jnp.maximum(h + b1_ref[...], 0.0)                               # ReLU, f32 epilogue
    h = h.astype(wh_ref.dtype)                                          # bf16 MXU input
    y = jnp.dot(h, wh_ref[...], preferred_element_type=jnp.float32)
    y = y + bh_ref[...]                                                 # (TB, OUT_PAD) f32

    # Lanes [0, L) -> mu (identity); lanes [L, 2L) -> lv = exp(0.5*y) + eta.
    # Padding lanes (>= 2L) hold zeros and are discarded by the wrapper slice.
    lane = jax.lax.broadcasted_iota(jnp.int32, y.shape, 1)
    lv = jnp.exp(0.5 * y) + ETA
    out_ref[...] = jnp.where(lane < latent_dim, y, lv).astype(out_ref.dtype)


# -----------------------------------------------------------------------------
# One-time weight packing (do NOT call per forward)
# -----------------------------------------------------------------------------
def prepare_params(params):
    """Pack/cast Enc parameters once: fuse the two heads, pad to 128 output
    lanes, cast matmul weights to bf16.  Returns a dict consumed by enc_forward."""
    latent_dim = params["w21"].shape[1]
    two_l = 2 * latent_dim
    out_pad = _round_up(two_l, 128)

    w1 = params["w1"].astype(COMPUTE_DTYPE)                              # (1024, 512) bf16
    b1 = params["b1"].astype(jnp.float32).reshape(1, HIDDEN_DIM)         # (1, 512) f32

    wh = jnp.concatenate([params["w21"], params["w22"]], axis=1)         # (512, 2L)
    bh = jnp.concatenate([params["b21"], params["b22"]], axis=1)         # (1, 2L)
    wh = jnp.pad(wh, ((0, 0), (0, out_pad - two_l))).astype(COMPUTE_DTYPE)
    bh = jnp.pad(bh, ((0, 0), (0, out_pad - two_l))).astype(jnp.float32)

    return {"w1": w1, "b1": b1, "wh": wh, "bh": bh,
            "latent_dim": latent_dim, "out_pad": out_pad}


# -----------------------------------------------------------------------------
# Forward
# -----------------------------------------------------------------------------
def enc_forward(x, packed):
    """x: (B, 1, 32, 32) float32.  Returns (mu, lv), each (B, latent_dim) f32."""
    B = x.shape[0]
    latent_dim = packed["latent_dim"]
    out_pad = packed["out_pad"]

    # Pure reshape (contiguous, free) -- no cast, no pad.
    x_flat = x.reshape(B, DATA_DIM)

    # Batch tile: big enough to amortize per-step overhead, >= 8 (sublane),
    # capped so the grid has >= 2 steps whenever possible (v7x megacore).
    half_b = max(8, _round_up(pl.cdiv(B, 2), 8))
    TB = min(MAX_TB, half_b)
    grid = (pl.cdiv(B, TB),)

    flops = 2 * B * DATA_DIM * HIDDEN_DIM + 2 * B * HIDDEN_DIM * out_pad
    bytes_accessed = (
        x_flat.size * 4                                    # f32 x, read once in-kernel
        + packed["w1"].size * 2 + packed["wh"].size * 2    # bf16 weights
        + packed["b1"].size * 4 + packed["bh"].size * 4    # f32 biases
        + B * out_pad * 4                                  # f32 output slab
    )

    out = pl.pallas_call(
        functools.partial(_enc_kernel, latent_dim=latent_dim),
        out_shape=jax.ShapeDtypeStruct((B, out_pad), jnp.float32),
        grid_spec=pltpu.PrefetchScalarGridSpec(
            num_scalar_prefetch=0,
            grid=grid,
            in_specs=[
                pl.BlockSpec((TB, DATA_DIM), lambda i: (i, 0)),          # x tile (f32)
                pl.BlockSpec((DATA_DIM, HIDDEN_DIM), lambda i: (0, 0)),  # W1 resident
                pl.BlockSpec((1, HIDDEN_DIM), lambda i: (0, 0)),         # b1 resident
                pl.BlockSpec((HIDDEN_DIM, out_pad), lambda i: (0, 0)),   # fused head W resident
                pl.BlockSpec((1, out_pad), lambda i: (0, 0)),            # fused head b resident
            ],
            out_specs=pl.BlockSpec((TB, out_pad), lambda i: (i, 0)),
        ),
        compiler_params=pltpu.CompilerParams(
            dimension_semantics=("parallel",),          # megacore-shard batch on v7x
            vmem_limit_bytes=32 * 1024 * 1024,
        ),
        cost_estimate=pl.CostEstimate(
            flops=flops,
            transcendentals=B * out_pad,
            bytes_accessed=bytes_accessed,
        ),
    )(x_flat, packed["w1"], packed["b1"], packed["wh"], packed["bh"])

    mu = out[:, :latent_dim]
    lv = out[:, latent_dim:2 * latent_dim]
    return mu, lv


# -----------------------------------------------------------------------------
# Parameter init + pure-JAX reference
# -----------------------------------------------------------------------------
def init_params(key, latent_dim):
    """Deterministic synthetic parameters, PyTorch-Linear-style fan-in scaling.
    Weights stored already transposed ((in, out)); biases stored as (1, out)."""
    k1, k2, k3, k4, k5, k6 = jax.random.split(key, 6)

    def lin(kw, kb, fan_in, fan_out):
        bound = 1.0 / jnp.sqrt(jnp.float32(fan_in))
        w = jax.random.uniform(kw, (fan_in, fan_out), jnp.float32, -bound, bound)
        b = jax.random.uniform(kb, (1, fan_out), jnp.float32, -bound, bound)
        return w, b

    w1, b1 = lin(k1, k2, DATA_DIM, HIDDEN_DIM)
    w21, b21 = lin(k3, k4, HIDDEN_DIM, latent_dim)
    w22, b22 = lin(k5, k6, HIDDEN_DIM, latent_dim)
    return {"w1": w1, "b1": b1, "w21": w21, "b21": b21, "w22": w22, "b22": b22}


def enc_reference(x, params):
    """Pure-JAX reference mirroring the kernel's bf16-input / f32-accumulate math."""
    B = x.shape[0]
    xf = x.reshape(B, DATA_DIM).astype(COMPUTE_DTYPE)
    w1 = params["w1"].astype(COMPUTE_DTYPE)
    w21 = params["w21"].astype(COMPUTE_DTYPE)
    w22 = params["w22"].astype(COMPUTE_DTYPE)
    h = jnp.dot(xf, w1, preferred_element_type=jnp.float32) + params["b1"]
    h = jnp.maximum(h, 0.0).astype(COMPUTE_DTYPE)
    mu = jnp.dot(h, w21, preferred_element_type=jnp.float32) + params["b21"]
    lg = jnp.dot(h, w22, preferred_element_type=jnp.float32) + params["b22"]
    lv = jnp.exp(0.5 * lg) + ETA
    return mu, lv


if __name__ == "__main__":
    key = jax.random.PRNGKey(0)
    kx, kp = jax.random.split(key)

    B = 2
    latent_dim = 16
    x = jax.random.normal(kx, (B, 1, 32, 32), jnp.float32)   # NCHW like torch
    params = init_params(kp, latent_dim)
    packed = prepare_params(params)                           # one-time weight packing

    mu, lv = enc_forward(x, packed)
    jax.block_until_ready((mu, lv))

    mu_ref, lv_ref = enc_reference(x, params)
    assert mu.shape == (B, latent_dim) and lv.shape == (B, latent_dim)
    assert jnp.allclose(mu, mu_ref, atol=1e-2, rtol=1e-2), "mu mismatch"
    assert jnp.allclose(lv, lv_ref, atol=1e-2, rtol=1e-2), "lv mismatch"

    print("KERNEL_OK")
</pallas_src>

<mosaic_0001>
module attributes {stable_mosaic.version = 11 : i64} {
  func.func @_enc_kernel(%arg0: i32, %arg1: memref<8x1024xf32, #tpu.memory_space<vmem>>, %arg2: memref<1024x512xbf16, #tpu.memory_space<vmem>>, %arg3: memref<1x512xf32, #tpu.memory_space<vmem>>, %arg4: memref<512x128xbf16, #tpu.memory_space<vmem>>, %arg5: memref<1x128xf32, #tpu.memory_space<vmem>>, %arg6: memref<8x128xf32, #tpu.memory_space<vmem>>) attributes {dimension_semantics = [#tpu.dimension_semantics<parallel>], iteration_bounds = array<i64: 1>, scalar_prefetch = 0 : i64, scratch_operands = 0 : i64, tpu.core_type = #tpu.core_type<tc>, window_params = [{transform_indices = @transform_0, window_bounds = array<i64: 8, 1024>}, {pipeline_mode = #tpu.pipeline_mode<synchronous>, transform_indices = @transform_1, window_bounds = array<i64: 1024, 512>}, {pipeline_mode = #tpu.pipeline_mode<synchronous>, transform_indices = @transform_2, window_bounds = array<i64: 1, 512>}, {pipeline_mode = #tpu.pipeline_mode<synchronous>, transform_indices = @transform_3, window_bounds = array<i64: 512, 128>}, {pipeline_mode = #tpu.pipeline_mode<synchronous>, transform_indices = @transform_4, window_bounds = array<i64: 1, 128>}, {transform_indices = @transform_5, window_bounds = array<i64: 8, 128>}]} {
    %c0 = arith.constant 0 : index
    %c0_0 = arith.constant 0 : index
    %0 = vector.load %arg1[%c0, %c0_0] : memref<8x1024xf32, #tpu.memory_space<vmem>>, vector<8x1024xf32>
    %1 = arith.truncf %0 : vector<8x1024xf32> to vector<8x1024xbf16>
    %c0_1 = arith.constant 0 : index
    %c0_2 = arith.constant 0 : index
    %2 = vector.load %arg2[%c0_1, %c0_2] : memref<1024x512xbf16, #tpu.memory_space<vmem>>, vector<1024x512xbf16>
    %cst = arith.constant dense<0.000000e+00> : vector<8x512xf32>
    %3 = tpu.matmul %1, %2, %cst {dimension_numbers = #tpu.dot_dimension_numbers<[1], [0], [0], [1], [0, 0, 1, 1], [], []>} : vector<8x1024xbf16>, vector<1024x512xbf16>, vector<8x512xf32> -> vector<8x512xf32>
    %c0_3 = arith.constant 0 : index
    %c0_4 = arith.constant 0 : index
    %4 = vector.load %arg3[%c0_3, %c0_4] : memref<1x512xf32, #tpu.memory_space<vmem>>, vector<1x512xf32>
    %5 = vector.broadcast %4 : vector<1x512xf32> to vector<8x512xf32>
    %6 = arith.addf %3, %5 : vector<8x512xf32>
    %cst_5 = arith.constant 0.000000e+00 : f32
    %7 = vector.broadcast %cst_5 : f32 to vector<8x512xf32>
    %8 = arith.maximumf %6, %7 : vector<8x512xf32>
    %9 = arith.truncf %8 : vector<8x512xf32> to vector<8x512xbf16>
    %c0_6 = arith.constant 0 : index
    %c0_7 = arith.constant 0 : index
    %10 = vector.load %arg4[%c0_6, %c0_7] : memref<512x128xbf16, #tpu.memory_space<vmem>>, vector<512x128xbf16>
    %cst_8 = arith.constant dense<0.000000e+00> : vector<8x128xf32>
    %11 = tpu.matmul %9, %10, %cst_8 {dimension_numbers = #tpu.dot_dimension_numbers<[1], [0], [0], [1], [0, 0, 1, 1], [], []>} : vector<8x512xbf16>, vector<512x128xbf16>, vector<8x128xf32> -> vector<8x128xf32>
    %c0_9 = arith.constant 0 : index
    %c0_10 = arith.constant 0 : index
    %12 = vector.load %arg5[%c0_9, %c0_10] : memref<1x128xf32, #tpu.memory_space<vmem>>, vector<1x128xf32>
    %13 = vector.broadcast %12 : vector<1x128xf32> to vector<8x128xf32>
    %14 = arith.addf %11, %13 : vector<8x128xf32>
    %15 = tpu.iota {dimensions = array<i32: 1>} : vector<8x128xi32>
    %cst_11 = arith.constant 5.000000e-01 : f32
    %16 = vector.broadcast %cst_11 : f32 to vector<8x128xf32>
    %17 = arith.mulf %16, %14 : vector<8x128xf32>
    %18 = math.exp %17 : vector<8x128xf32>
    %cst_12 = arith.constant 9.99999997E-7 : f32
    %19 = vector.broadcast %cst_12 : f32 to vector<8x128xf32>
    %20 = arith.addf %18, %19 : vector<8x128xf32>
    %c16_i32 = arith.constant 16 : i32
    %21 = vector.broadcast %c16_i32 : i32 to vector<8x128xi32>
    %22 = arith.cmpi slt, %15, %21 : vector<8x128xi32>
    %23 = arith.select %22, %14, %20 : vector<8x128xi1>, vector<8x128xf32>
    %c0_13 = arith.constant 0 : index
    %c0_14 = arith.constant 0 : index
    %24 = vector.load %arg6[%c0_13, %c0_14] : memref<8x128xf32, #tpu.memory_space<vmem>>, vector<8x128xf32>
    tpu.vector_store %arg6[%c0_13, %c0_14], %23 {strides = array<i32>} : memref<8x128xf32, #tpu.memory_space<vmem>>, vector<8x128xf32>,
    return
  }
  func.func @transform_0(%arg0: i32) -> (i32, i32) {
    %c0_i32 = arith.constant 0 : i32
    %c0_i32_0 = arith.constant 0 : i32
    return %arg0, %c0_i32 : i32, i32
  }
  func.func @transform_1(%arg0: i32) -> (i32, i32) {
    %c0_i32 = arith.constant 0 : i32
    %c0_i32_0 = arith.constant 0 : i32
    %c0_i32_1 = arith.constant 0 : i32
    return %c0_i32, %c0_i32_0 : i32, i32
  }
  func.func @transform_2(%arg0: i32) -> (i32, i32) {
    %c0_i32 = arith.constant 0 : i32
    %c0_i32_0 = arith.constant 0 : i32
    %c0_i32_1 = arith.constant 0 : i32
    return %c0_i32, %c0_i32_0 : i32, i32
  }
  func.func @transform_3(%arg0: i32) -> (i32, i32) {
    %c0_i32 = arith.constant 0 : i32
    %c0_i32_0 = arith.constant 0 : i32
    %c0_i32_1 = arith.constant 0 : i32
    return %c0_i32, %c0_i32_0 : i32, i32
  }
  func.func @transform_4(%arg0: i32) -> (i32, i32) {
    %c0_i32 = arith.constant 0 : i32
    %c0_i32_0 = arith.constant 0 : i32
    %c0_i32_1 = arith.constant 0 : i32
    return %c0_i32, %c0_i32_0 : i32, i32
  }
  func.func @transform_5(%arg0: i32) -> (i32, i32) {
    %c0_i32 = arith.constant 0 : i32
    %c0_i32_0 = arith.constant 0 : i32
    return %arg0, %c0_i32 : i32, i32
  }
}

</mosaic_0001>

<llo_original>
// kernel: tpu_custom_call.1
$region0: #{tpu_custom_call.1}
  #allocation0 [shape = 'u32[]', space=smem, size = 0x4, offset = 0x4, fixed_abs, tag = 'smem constant byte address 0x4 - core index']
  #allocation1 [shape = 'u32[144,128]{1,0:T(1,128)}', space=vmem, size = 0x12000, scoped, tag = 'internal scratch']
  %s0 = inlined_call_operand.hbm [shape: f32[2,1024], index: 0, kind: input, shape index: {}]
  %s1 = inlined_call_operand.hbm [shape: bf16[1024,512], index: 1, kind: input, shape index: {}]
  %s2 = inlined_call_operand.vmem [shape: f32[1,512], index: 2, kind: input, shape index: {}]
  %s3 = inlined_call_operand.hbm [shape: bf16[512,128], index: 3, kind: input, shape index: {}]
  %s4 = inlined_call_operand.vmem [shape: f32[1,128], index: 4, kind: input, shape index: {}]
  %s5 = inlined_call_operand.hbm [shape: f32[2,128], index: 5, kind: output, shape index: {}]
  %s6 = sld [smem:[#allocation0]]
  $region42: #{tpu_custom_call.1} parent=0
    _
  %s8 = ssub.s32 1, %s6
  %s9 = scalar_select 0, %s8, %s6
  $region1: #{tpu_custom_call.1} parent=0
    #allocation2 [shape = 'u8[32768]{0}', space=vmem, size = 0x8000, scoped, tag = 'input window, operand 0, single buffered']
    #allocation3 [shape = 's32[1]{0}', space=sflag, size = 0x4, scoped, tag = 'scoped memory for tpu_custom_call.1']
    #allocation4 [shape = 's32[1]{0}', space=sflag, size = 0x4, scoped, tag = 'scoped memory for tpu_custom_call.1']
    #allocation5 [shape = 'u8[1048576]{0}', space=vmem, size = 0x100000, scoped, tag = 'input window, operand 1, single buffered']
    #allocation6 [shape = 's32[1]{0}', space=sflag, size = 0x4, scoped, tag = 'scoped memory for tpu_custom_call.1']
    #allocation7 [shape = 'u8[131072]{0}', space=vmem, size = 0x20000, scoped, tag = 'input window, operand 3, single buffered']
    #allocation8 [shape = 'u8[4096]{0}', space=vmem, size = 0x1000, scoped, tag = 'output window, operand 0, single buffered']
    %10 = vsyncpa [#allocation3], 0
    %11 = vsyncpa [#allocation6], 0
    %12 = vsyncpa [#allocation4], 0
    // Predicated region
    $region2: #{tpu_custom_call.1} parent=1 // pred_check
      _
    $region3: #{tpu_custom_call.1} parent=1 // pred_check_branch
      %14 = sbr.rel (0) target = $region5
    $region4: #{tpu_custom_call.1} parent=1 // pred_region
      %s16 = ssub.s32 1024, 256
      %17 = vsyncadd [#allocation3], %s16
      %s18 = sshll.u32 [#allocation2], 4
      %s19 = int_to_ptr.vmem [resolvable:$true] %s18
      %24 = dma.hbm_to_vmem [thread:$0]  %s0, 256, %s19, [#allocation3], 256, 256, 16
    $region5: #{tpu_custom_call.1} parent=1 // pred_fallthru
      _
    // Predicated region
    $region6: #{tpu_custom_call.1} parent=1 // pred_check
      _
    $region7: #{tpu_custom_call.1} parent=1 // pred_check_branch
      %26 = sbr.rel (0) target = $region9
    $region8: #{tpu_custom_call.1} parent=1 // pred_region
      %s28 = ssub.s32 32768, 32768
      %29 = vsyncadd [#allocation6], %s28
      %s30 = sshll.u32 [#allocation5], 4
      %s31 = int_to_ptr.vmem [resolvable:$true] %s30
      %36 = dma.hbm_to_vmem [thread:$0]  %s1, 32768, %s31, [#allocation6], 256, 256, 16
    $region9: #{tpu_custom_call.1} parent=1 // pred_fallthru
      _
    // Predicated region
    $region10: #{tpu_custom_call.1} parent=1 // pred_check
      _
    $region11: #{tpu_custom_call.1} parent=1 // pred_check_branch
      %38 = sbr.rel (0) target = $region13
    $region12: #{tpu_custom_call.1} parent=1 // pred_region
      _
    $region13: #{tpu_custom_call.1} parent=1 // pred_fallthru
      _
    // Predicated region
    $region14: #{tpu_custom_call.1} parent=1 // pred_check
      _
    $region15: #{tpu_custom_call.1} parent=1 // pred_check_branch
      %40 = sbr.rel (0) target = $region17
    $region16: #{tpu_custom_call.1} parent=1 // pred_region
      %s42 = ssub.s32 4096, 4096
      %43 = vsyncadd [#allocation6], %s42
      %s44 = sshll.u32 [#allocation7], 4
      %s45 = int_to_ptr.vmem [resolvable:$true] %s44
      %50 = dma.hbm_to_vmem [thread:$0]  %s3, 4096, %s45, [#allocation6], 64, 64, 4
    $region17: #{tpu_custom_call.1} parent=1 // pred_fallthru
      _
    // Predicated region
    $region18: #{tpu_custom_call.1} parent=1 // pred_check
      _
    $region19: #{tpu_custom_call.1} parent=1 // pred_check_branch
      %52 = sbr.rel (0) target = $region21
    $region20: #{tpu_custom_call.1} parent=1 // pred_region
      _
    $region21: #{tpu_custom_call.1} parent=1 // pred_fallthru
      _
    // Predicated region
    $region22: #{tpu_custom_call.1} parent=1 // pred_check
      _
    $region23: #{tpu_custom_call.1} parent=1 // pred_check_branch
      %54 = sbr.rel (0) target = $region25
    $region24: #{tpu_custom_call.1} parent=1 // pred_region
      %55 = dma.done [#allocation3], 1024
    $region25: #{tpu_custom_call.1} parent=1 // pred_fallthru
      _
    // Predicated region
    $region26: #{tpu_custom_call.1} parent=1 // pred_check
      _
    $region27: #{tpu_custom_call.1} parent=1 // pred_check_branch
      %57 = sbr.rel (0) target = $region29
    $region28: #{tpu_custom_call.1} parent=1 // pred_region
      %58 = dma.done [#allocation6], 32768
    $region29: #{tpu_custom_call.1} parent=1 // pred_fallthru
      _
    // Predicated region
    $region30: #{tpu_custom_call.1} parent=1 // pred_check
      _
    $region31: #{tpu_custom_call.1} parent=1 // pred_check_branch
      %60 = sbr.rel (0) target = $region33
    $region32: #{tpu_custom_call.1} parent=1 // pred_region
      %61 = dma.done [#allocation6], 4096
    $region33: #{tpu_custom_call.1} parent=1 // pred_fallthru
      _
    %v63 = vld [vmem:[#allocation2] sm:$0xff]
    %v64 = vld [vmem:[#allocation2 + $0x8] sm:$0xff]
    %v65 = vld [vmem:[#allocation2 + $0x10] sm:$0xff]
    %v66 = vld [vmem:[#allocation2 + $0x18] sm:$0xff]
    %v67 = vld [vmem:[#allocation2 + $0x20] sm:$0xff]
    %v68 = vld [vmem:[#allocation2 + $0x28] sm:$0xff]
    %v69 = vld [vmem:[#allocation2 + $0x30] sm:$0xff]
    %v70 = vld [vmem:[#allocation2 + $0x38] sm:$0xff]
    %v79 = vcombine.low %v63, %v65
    %v80 = vcombine.high %v63, %v65
    %v81 = vcombine.low %v67, %v69
    %v82 = vcombine.high %v67, %v69
    %v84 = vunpack.c.l.s4 1983009808
    %v85 = vunpack.c.0.s8 %v84
    %v86 = vlaneseq
    %v87 = vshrl.u32 %v86, 7
    %v88 = vsub.s32 %v85, %v87
    %v89 = vrot.slane %v79, %v88
    %v91 = vunpack.c.l.s4 1983009808
    %v92 = vunpack.c.0.s8 %v91
    %v93 = vlaneseq
    %v94 = vshrl.u32 %v93, 7
    %v95 = vsub.s32 %v92, %v94
    %v96 = vrot.slane %v80, %v95
    %v98 = vunpack.c.l.s4 1983009808
    %v99 = vunpack.c.0.s8 %v98
    %v100 = vlaneseq
    %v101 = vshrl.u32 %v100, 7
    %v102 = vsub.s32 %v99, %v101
    %v103 = vrot.slane %v81, %v102
    %v105 = vunpack.c.l.s4 1983009808
    %v106 = vunpack.c.0.s8 %v105
    %v107 = vlaneseq
    %v108 = vshrl.u32 %v107, 7
    %v109 = vsub.s32 %v106, %v108
    %v110 = vrot.slane %v82, %v109
    %v111 = vcombine.low %v89, %v103
    %v112 = vcombine.high %v89, %v103
    %v113 = vcombine.low %v96, %v110
    %v114 = vcombine.high %v96, %v110
    %v115 = vcombine.low %v64, %v66
    %v116 = vcombine.high %v64, %v66
    %v117 = vcombine.low %v68, %v70
    %v118 = vcombine.high %v68, %v70
    %v120 = vunpack.c.l.s4 1983009808
    %v121 = vunpack.c.0.s8 %v120
    %v122 = vlaneseq
    %v123 = vshrl.u32 %v122, 7
    %v124 = vsub.s32 %v121, %v123
    %v125 = vrot.slane %v115, %v124
    %v127 = vunpack.c.l.s4 1983009808
    %v128 = vunpack.c.0.s8 %v127
    %v129 = vlaneseq
    %v130 = vshrl.u32 %v129, 7
    %v131 = vsub.s32 %v128, %v130
    %v132 = vrot.slane %v116, %v131
    %v134 = vunpack.c.l.s4 1983009808
    %v135 = vunpack.c.0.s8 %v134
    %v136 = vlaneseq
    %v137 = vshrl.u32 %v136, 7
    %v138 = vsub.s32 %v135, %v137
    %v139 = vrot.slane %v117, %v138
    %v141 = vunpack.c.l.s4 1983009808
    %v142 = vunpack.c.0.s8 %v141
    %v143 = vlaneseq
    %v144 = vshrl.u32 %v143, 7
    %v145 = vsub.s32 %v142, %v144
    %v146 = vrot.slane %v118, %v145
    %v147 = vcombine.low %v125, %v139
    %v148 = vcombine.high %v125, %v139
    %v149 = vcombine.low %v132, %v146
    %v150 = vcombine.high %v132, %v146
    %v159 = vpack.c.bf16 %v111, %v111
    %v160 = vpack.c.bf16 %v112, %v112
    %v161 = vpack.c.bf16 %v113, %v113
    %v162 = vpack.c.bf16 %v114, %v114
    %v163 = vpack.c.bf16 %v147, %v147
    %v164 = vpack.c.bf16 %v148, %v148
    %v165 = vpack.c.bf16 %v149, %v149
    %v166 = vpack.c.bf16 %v150, %v150
    %v167 = vld [vmem:[#allocation5] sm:$0xff]
    %v168 = vld [vmem:[#allocation5 + $0x8] sm:$0xff]
    %v169 = vld [vmem:[#allocation5 + $0x10] sm:$0xff]
    %v170 = vld [vmem:[#allocation5 + $0x18] sm:$0xff]
    %v171 = vld [vmem:[#allocation5 + $0x20] sm:$0xff]
    %v172 = vld [vmem:[#allocation5 + $0x28] sm:$0xff]
    %v173 = vld [vmem:[#allocation5 + $0x30] sm:$0xff]
    %v174 = vld [vmem:[#allocation5 + $0x38] sm:$0xff]
    %v175 = vld [vmem:[#allocation5 + $0x40] sm:$0xff]
    %v176 = vld [vmem:[#allocation5 + $0x48] sm:$0xff]
    %v177 = vld [vmem:[#allocation5 + $0x50] sm:$0xff]
    %v178 = vld [vmem:[#allocation5 + $0x58] sm:$0xff]
    %v179 = vld [vmem:[#allocation5 + $0x60] sm:$0xff]
    %v180 = vld [vmem:[#allocation5 + $0x68] sm:$0xff]
    %v181 = vld [vmem:[#allocation5 + $0x70] sm:$0xff]
    %v182 = vld [vmem:[#allocation5 + $0x78] sm:$0xff]
    %v183 = vld [vmem:[#allocation5 + $0x80] sm:$0xff]
    %v184 = vld [vmem:[#allocation5 + $0x88] sm:$0xff]
    %v185 = vld [vmem:[#allocation5 + $0x90] sm:$0xff]
    %v186 = vld [vmem:[#allocation5 + $0x98] sm:$0xff]
    %v187 = vld [vmem:[#allocation5 + $0xa0] sm:$0xff]
    %v188 = vld [vmem:[#allocation5 + $0xa8] sm:$0xff]
    %v189 = vld [vmem:[#allocation5 + $0xb0] sm:$0xff]
    %v190 = vld [vmem:[#allocation5 + $0xb8] sm:$0xff]
    %v191 = vld [vmem:[#allocation5 + $0xc0] sm:$0xff]
    %v192 = vld [vmem:[#allocation5 + $0xc8] sm:$0xff]
    %v193 = vld [vmem:[#allocation5 + $0xd0] sm:$0xff]
    %v194 = vld [vmem:[#allocation5 + $0xd8] sm:$0xff]
    %v195 = vld [vmem:[#allocation5 + $0xe0] sm:$0xff]
    %v196 = vld [vmem:[#allocation5 + $0xe8] sm:$0xff]
    %v197 = vld [vmem:[#allocation5 + $0xf0] sm:$0xff]
    %v198 = vld [vmem:[#allocation5 + $0xf8] sm:$0xff]
    %v199 = vld [vmem:[#allocation5 + $0x100] sm:$0xff]
    %v200 = vld [vmem:[#allocation5 + $0x108] sm:$0xff]
    %v201 = vld [vmem:[#allocation5 + $0x110] sm:$0xff]
    %v202 = vld [vmem:[#allocation5 + $0x118] sm:$0xff]
    %v203 = vld [vmem:[#allocation5 + $0x120] sm:$0xff]
    %v204 = vld [vmem:[#allocation5 + $0x128] sm:$0xff]
    %v205 = vld [vmem:[#allocation5 + $0x130] sm:$0xff]
    %v206 = vld [vmem:[#allocation5 + $0x138] sm:$0xff]
    %v207 = vld [vmem:[#allocation5 + $0x140] sm:$0xff]
    %v208 = vld [vmem:[#allocation5 + $0x148] sm:$0xff]
    %v209 = vld [vmem:[#allocation5 + $0x150] sm:$0xff]
    %v210 = vld [vmem:[#allocation5 + $0x158] sm:$0xff]
    %v211 = vld [vmem:[#allocation5 + $0x160] sm:$0xff]
    %v212 = vld [vmem:[#allocation5 + $0x168] sm:$0xff]
    %v213 = vld [vmem:[#allocation5 + $0x170] sm:$0xff]
    %v214 = vld [vmem:[#allocation5 + $0x178] sm:$0xff]
    %v215 = vld [vmem:[#allocation5 + $0x180] sm:$0xff]
    %v216 = vld [vmem:[#allocation5 + $0x188] sm:$0xff]
    %v217 = vld [vmem:[#allocation5 + $0x190] sm:$0xff]
    %v218 = vld [vmem:[#allocation5 + $0x198] sm:$0xff]
    %v219 = vld [vmem:[#allocation5 + $0x1a0] sm:$0xff]
    %v220 = vld [vmem:[#allocation5 + $0x1a8] sm:$0xff]
    %v221 = vld [vmem:[#allocation5 + $0x1b0] sm:$0xff]
    %v222 = vld [vmem:[#allocation5 + $0x1b8] sm:$0xff]
    %v223 = vld [vmem:[#allocation5 + $0x1c0] sm:$0xff]
    %v224 = vld [vmem:[#allocation5 + $0x1c8] sm:$0xff]
    %v225 = vld [vmem:[#allocation5 + $0x1d0] sm:$0xff]
    %v226 = vld [vmem:[#allocation5 + $0x1d8] sm:$0xff]
    %v227 = vld [vmem:[#allocation5 + $0x1e0] sm:$0xff]
    %v228 = vld [vmem:[#allocation5 + $0x1e8] sm:$0xff]
    %v229 = vld [vmem:[#allocation5 + $0x1f0] sm:$0xff]
    %v230 = vld [vmem:[#allocation5 + $0x1f8] sm:$0xff]
    %v231 = vld [vmem:[#allocation5 + $0x200] sm:$0xff]
    %v232 = vld [vmem:[#allocation5 + $0x208] sm:$0xff]
    %v233 = vld [vmem:[#allocation5 + $0x210] sm:$0xff]
    %v234 = vld [vmem:[#allocation5 + $0x218] sm:$0xff]
    %v235 = vld [vmem:[#allocation5 + $0x220] sm:$0xff]
    %v236 = vld [vmem:[#allocation5 + $0x228] sm:$0xff]
    %v237 = vld [vmem:[#allocation5 + $0x230] sm:$0xff]
    %v238 = vld [vmem:[#allocation5 + $0x238] sm:$0xff]
    %v239 = vld [vmem:[#allocation5 + $0x240] sm:$0xff]
    %v240 = vld [vmem:[#allocation5 + $0x248] sm:$0xff]
    %v241 = vld [vmem:[#allocation5 + $0x250] sm:$0xff]
    %v242 = vld [vmem:[#allocation5 + $0x258] sm:$0xff]
    %v243 = vld [vmem:[#allocation5 + $0x260] sm:$0xff]
    %v244 = vld [vmem:[#allocation5 + $0x268] sm:$0xff]
    %v245 = vld [vmem:[#allocation5 + $0x270] sm:$0xff]
    %v246 = vld [vmem:[#allocation5 + $0x278] sm:$0xff]
    %v247 = vld [vmem:[#allocation5 + $0x280] sm:$0xff]
    %v248 = vld [vmem:[#allocation5 + $0x288] sm:$0xff]
    %v249 = vld [vmem:[#allocation5 + $0x290] sm:$0xff]
    %v250 = vld [vmem:[#allocation5 + $0x298] sm:$0xff]
    %v251 = vld [vmem:[#allocation5 + $0x2a0] sm:$0xff]
    %v252 = vld [vmem:[#allocation5 + $0x2a8] sm:$0xff]
    %v253 = vld [vmem:[#allocation5 + $0x2b0] sm:$0xff]
    %v254 = vld [vmem:[#allocation5 + $0x2b8] sm:$0xff]
    %v255 = vld [vmem:[#allocation5 + $0x2c0] sm:$0xff]
    %v256 = vld [vmem:[#allocation5 + $0x2c8] sm:$0xff]
    %v257 = vld [vmem:[#allocation5 + $0x2d0] sm:$0xff]
    %v258 = vld [vmem:[#allocation5 + $0x2d8] sm:$0xff]
    %v259 = vld [vmem:[#allocation5 + $0x2e0] sm:$0xff]
    %v260 = vld [vmem:[#allocation5 + $0x2e8] sm:$0xff]
    %v261 = vld [vmem:[#allocation5 + $0x2f0] sm:$0xff]
    %v262 = vld [vmem:[#allocation5 + $0x2f8] sm:$0xff]
    %v263 = vld [vmem:[#allocation5 + $0x300] sm:$0xff]
    %v264 = vld [vmem:[#allocation5 + $0x308] sm:$0xff]
    %v265 = vld [vmem:[#allocation5 + $0x310] sm:$0xff]
    %v266 = vld [vmem:[#allocation5 + $0x318] sm:$0xff]
    %v267 = vld [vmem:[#allocation5 + $0x320] sm:$0xff]
    %v268 = vld [vmem:[#allocation5 + $0x328] sm:$0xff]
    %v269 = vld [vmem:[#allocation5 + $0x330] sm:$0xff]
    %v270 = vld [vmem:[#allocation5 + $0x338] sm:$0xff]
    %v271 = vld [vmem:[#allocation5 + $0x340] sm:$0xff]
    %v272 = vld [vmem:[#allocation5 + $0x348] sm:$0xff]
    %v273 = vld [vmem:[#allocation5 + $0x350] sm:$0xff]
    %v274 = vld [vmem:[#allocation5 + $0x358] sm:$0xff]
    %v275 = vld [vmem:[#allocation5 + $0x360] sm:$0xff]
    %v276 = vld [vmem:[#allocation5 + $0x368] sm:$0xff]
    %v277 = vld [vmem:[#allocation5 + $0x370] sm:$0xff]
    %v278 = vld [vmem:[#allocation5 + $0x378] sm:$0xff]
    %v279 = vld [vmem:[#allocation5 + $0x380] sm:$0xff]
    %v280 = vld [vmem:[#allocation5 + $0x388] sm:$0xff]
    %v281 = vld [vmem:[#allocation5 + $0x390] sm:$0xff]
    %v282 = vld [vmem:[#allocation5 + $0x398] sm:$0xff]
    %v283 = vld [vmem:[#allocation5 + $0x3a0] sm:$0xff]
    %v284 = vld [vmem:[#allocation5 + $0x3a8] sm:$0xff]
    %v285 = vld [vmem:[#allocation5 + $0x3b0] sm:$0xff]
    %v286 = vld [vmem:[#allocation5 + $0x3b8] sm:$0xff]
    %v287 = vld [vmem:[#allocation5 + $0x3c0] sm:$0xff]
    %v288 = vld [vmem:[#allocation5 + $0x3c8] sm:$0xff]
    %v289 = vld [vmem:[#allocation5 + $0x3d0] sm:$0xff]
    %v290 = vld [vmem:[#allocation5 + $0x3d8] sm:$0xff]
    %v291 = vld [vmem:[#allocation5 + $0x3e0] sm:$0xff]
    %v292 = vld [vmem:[#allocation5 + $0x3e8] sm:$0xff]
    %v293 = vld [vmem:[#allocation5 + $0x3f0] sm:$0xff]
    %v294 = vld [vmem:[#allocation5 + $0x3f8] sm:$0xff]
    %v295 = vld [vmem:[#allocation5 + $0x400] sm:$0xff]
    %v296 = vld [vmem:[#allocation5 + $0x408] sm:$0xff]
    %v297 = vld [vmem:[#allocation5 + $0x410] sm:$0xff]
    %v298 = vld [vmem:[#allocation5 + $0x418] sm:$0xff]
    %v299 = vld [vmem:[#allocation5 + $0x420] sm:$0xff]
    %v300 = vld [vmem:[#allocation5 + $0x428] sm:$0xff]
    %v301 = vld [vmem:[#allocation5 + $0x430] sm:$0xff]
    %v302 = vld [vmem:[#allocation5 + $0x438] sm:$0xff]
    %v303 = vld [vmem:[#allocation5 + $0x440] sm:$0xff]
    %v304 = vld [vmem:[#allocation5 + $0x448] sm:$0xff]
    %v305 = vld [vmem:[#allocation5 + $0x450] sm:$0xff]
    %v306 = vld [vmem:[#allocation5 + $0x458] sm:$0xff]
    %v307 = vld [vmem:[#allocation5 + $0x460] sm:$0xff]
    %v308 = vld [vmem:[#allocation5 + $0x468] sm:$0xff]
    %v309 = vld [vmem:[#allocation5 + $0x470] sm:$0xff]
    %v310 = vld [vmem:[#allocation5 + $0x478] sm:$0xff]
    %v311 = vld [vmem:[#allocation5 + $0x480] sm:$0xff]
    %v312 = vld [vmem:[#allocation5 + $0x488] sm:$0xff]
    %v313 = vld [vmem:[#allocation5 + $0x490] sm:$0xff]
    %v314 = vld [vmem:[#allocation5 + $0x498] sm:$0xff]
    %v315 = vld [vmem:[#allocation5 + $0x4a0] sm:$0xff]
    %v316 = vld [vmem:[#allocation5 + $0x4a8] sm:$0xff]
    %v317 = vld [vmem:[#allocation5 + $0x4b0] sm:$0xff]
    %v318 = vld [vmem:[#allocation5 + $0x4b8] sm:$0xff]
    %v319 = vld [vmem:[#allocation5 + $0x4c0] sm:$0xff]
    %v320 = vld [vmem:[#allocation5 + $0x4c8] sm:$0xff]
    %v321 = vld [vmem:[#allocation5 + $0x4d0] sm:$0xff]
    %v322 = vld [vmem:[#allocation5 + $0x4d8] sm:$0xff]
    %v323 = vld [vmem:[#allocation5 + $0x4e0] sm:$0xff]
    %v324 = vld [vmem:[#allocation5 + $0x4e8] sm:$0xff]
    %v325 = vld [vmem:[#allocation5 + $0x4f0] sm:$0xff]
    %v326 = vld [vmem:[#allocation5 + $0x4f8] sm:$0xff]
    %v327 = vld [vmem:[#allocation5 + $0x500] sm:$0xff]
    %v328 = vld [vmem:[#allocation5 + $0x508] sm:$0xff]
    %v329 = vld [vmem:[#allocation5 + $0x510] sm:$0xff]
    %v330 = vld [vmem:[#allocation5 + $0x518] sm:$0xff]
    %v331 = vld [vmem:[#allocation5 + $0x520] sm:$0xff]
    %v332 = vld [vmem:[#allocation5 + $0x528] sm:$0xff]
    %v333 = vld [vmem:[#allocation5 + $0x530] sm:$0xff]
    %v334 = vld [vmem:[#allocation5 + $0x538] sm:$0xff]
    %v335 = vld [vmem:[#allocation5 + $0x540] sm:$0xff]
    %v336 = vld [vmem:[#allocation5 + $0x548] sm:$0xff]
    %v337 = vld [vmem:[#allocation5 + $0x550] sm:$0xff]
    %v338 = vld [vmem:[#allocation5 + $0x558] sm:$0xff]
    %v339 = vld [vmem:[#allocation5 + $0x560] sm:$0xff]
    %v340 = vld [vmem:[#allocation5 + $0x568] sm:$0xff]
    %v341 = vld [vmem:[#allocation5 + $0x570] sm:$0xff]
    %v342 = vld [vmem:[#allocation5 + $0x578] sm:$0xff]
    %v343 = vld [vmem:[#allocation5 + $0x580] sm:$0xff]
    %v344 = vld [vmem:[#allocation5 + $0x588] sm:$0xff]
    %v345 = vld [vmem:[#allocation5 + $0x590] sm:$0xff]
    %v346 = vld [vmem:[#allocation5 + $0x598] sm:$0xff]
    %v347 = vld [vmem:[#allocation5 + $0x5a0] sm:$0xff]
    %v348 = vld [vmem:[#allocation5 + $0x5a8] sm:$0xff]
    %v349 = vld [vmem:[#allocation5 + $0x5b0] sm:$0xff]
    %v350 = vld [vmem:[#allocation5 + $0x5b8] sm:$0xff]
    %v351 = vld [vmem:[#allocation5 + $0x5c0] sm:$0xff]
    %v352 = vld [vmem:[#allocation5 + $0x5c8] sm:$0xff]
    %v353 = vld [vmem:[#allocation5 + $0x5d0] sm:$0xff]
    %v354 = vld [vmem:[#allocation5 + $0x5d8] sm:$0xff]
    %v355 = vld [vmem:[#allocation5 + $0x5e0] sm:$0xff]
    %v356 = vld [vmem:[#allocation5 + $0x5e8] sm:$0xff]
    %v357 = vld [vmem:[#allocation5 + $0x5f0] sm:$0xff]
    %v358 = vld [vmem:[#allocation5 + $0x5f8] sm:$0xff]
    %v359 = vld [vmem:[#allocation5 + $0x600] sm:$0xff]
    %v360 = vld [vmem:[#allocation5 + $0x608] sm:$0xff]
    %v361 = vld [vmem:[#allocation5 + $0x610] sm:$0xff]
    %v362 = vld [vmem:[#allocation5 + $0x618] sm:$0xff]
    %v363 = vld [vmem:[#allocation5 + $0x620] sm:$0xff]
    %v364 = vld [vmem:[#allocation5 + $0x628] sm:$0xff]
    %v365 = vld [vmem:[#allocation5 + $0x630] sm:$0xff]
    %v366 = vld [vmem:[#allocation5 + $0x638] sm:$0xff]
    %v367 = vld [vmem:[#allocation5 + $0x640] sm:$0xff]
    %v368 = vld [vmem:[#allocation5 + $0x648] sm:$0xff]
    %v369 = vld [vmem:[#allocation5 + $0x650] sm:$0xff]
    %v370 = vld [vmem:[#allocation5 + $0x658] sm:$0xff]
    %v371 = vld [vmem:[#allocation5 + $0x660] sm:$0xff]
    %v372 = vld [vmem:[#allocation5 + $0x668] sm:$0xff]
    %v373 = vld [vmem:[#allocation5 + $0x670] sm:$0xff]
    %v374 = vld [vmem:[#allocation5 + $0x678] sm:$0xff]
    %v375 = vld [vmem:[#allocation5 + $0x680] sm:$0xff]
    %v376 = vld [vmem:[#allocation5 + $0x688] sm:$0xff]
    %v377 = vld [vmem:[#allocation5 + $0x690] sm:$0xff]
    %v378 = vld [vmem:[#allocation5 + $0x698] sm:$0xff]
    %v379 = vld [vmem:[#allocation5 + $0x6a0] sm:$0xff]
    %v380 = vld [vmem:[#allocation5 + $0x6a8] sm:$0xff]
    %v381 = vld [vmem:[#allocation5 + $0x6b0] sm:$0xff]
    %v382 = vld [vmem:[#allocation5 + $0x6b8] sm:$0xff]
    %v383 = vld [vmem:[#allocation5 + $0x6c0] sm:$0xff]
    %v384 = vld [vmem:[#allocation5 + $0x6c8] sm:$0xff]
    %v385 = vld [vmem:[#allocation5 + $0x6d0] sm:$0xff]
    %v386 = vld [vmem:[#allocation5 + $0x6d8] sm:$0xff]
    %v387 = vld [vmem:[#allocation5 + $0x6e0] sm:$0xff]
    %v388 = vld [vmem:[#allocation5 + $0x6e8] sm:$0xff]
    %v389 = vld [vmem:[#allocation5 + $0x6f0] sm:$0xff]
    %v390 = vld [vmem:[#allocation5 + $0x6f8] sm:$0xff]
    %v391 = vld [vmem:[#allocation5 + $0x700] sm:$0xff]
    %v392 = vld [vmem:[#allocation5 + $0x708] sm:$0xff]
    %v393 = vld [vmem:[#allocation5 + $0x710] sm:$0xff]
    %v394 = vld [vmem:[#allocation5 + $0x718] sm:$0xff]
    %v395 = vld [vmem:[#allocation5 + $0x720] sm:$0xff]
    %v396 = vld [vmem:[#allocation5 + $0x728] sm:$0xff]
    %v397 = vld [vmem:[#allocation5 + $0x730] sm:$0xff]
    %v398 = vld [vmem:[#allocation5 + $0x738] sm:$0xff]
    %v399 = vld [vmem:[#allocation5 + $0x740] sm:$0xff]
    %v400 = vld [vmem:[#allocation5 + $0x748] sm:$0xff]
    %v401 = vld [vmem:[#allocation5 + $0x750] sm:$0xff]
    %v402 = vld [vmem:[#allocation5 + $0x758] sm:$0xff]
    %v403 = vld [vmem:[#allocation5 + $0x760] sm:$0xff]
    %v404 = vld [vmem:[#allocation5 + $0x768] sm:$0xff]
    %v405 = vld [vmem:[#allocation5 + $0x770] sm:$0xff]
    %v406 = vld [vmem:[#allocation5 + $0x778] sm:$0xff]
    %v407 = vld [vmem:[#allocation5 + $0x780] sm:$0xff]
    %v408 = vld [vmem:[#allocation5 + $0x788] sm:$0xff]
    %v409 = vld [vmem:[#allocation5 + $0x790] sm:$0xff]
    %v410 = vld [vmem:[#allocation5 + $0x798] sm:$0xff]
    %v411 = vld [vmem:[#allocation5 + $0x7a0] sm:$0xff]
    %v412 = vld [vmem:[#allocation5 + $0x7a8] sm:$0xff]
    %v413 = vld [vmem:[#allocation5 + $0x7b0] sm:$0xff]
    %v414 = vld [vmem:[#allocation5 + $0x7b8] sm:$0xff]
    %v415 = vld [vmem:[#allocation5 + $0x7c0] sm:$0xff]
    %v416 = vld [vmem:[#allocation5 + $0x7c8] sm:$0xff]
    %v417 = vld [vmem:[#allocation5 + $0x7d0] sm:$0xff]
    %v418 = vld [vmem:[#allocation5 + $0x7d8] sm:$0xff]
    %v419 = vld [vmem:[#allocation5 + $0x7e0] sm:$0xff]
    %v420 = vld [vmem:[#allocation5 + $0x7e8] sm:$0xff]
    %v421 = vld [vmem:[#allocation5 + $0x7f0] sm:$0xff]
    %v422 = vld [vmem:[#allocation5 + $0x7f8] sm:$0xff]
    %v423 = vld [vmem:[%s2] sm:$0xf]
    %v425 = vlaneseq
    %v426 = vshrl.u32 %v425, 7
    %v427 = vsub.s32 0, %v426
    %v428 = vrot.slane %v423, %v427
    %v429 = vlaneseq
    %v430 = vshrl.u32 %v429, 7
    %v431 = vsub.s32 1, %v430
    %v432 = vrot.slane %v423, %v431
    %v433 = vlaneseq
    %v434 = vshrl.u32 %v433, 7
    %v435 = vsub.s32 2, %v434
    %v436 = vrot.slane %v423, %v435
    %v437 = vlaneseq
    %v438 = vshrl.u32 %v437, 7
    %v439 = vsub.s32 3, %v438
    %v440 = vrot.slane %v423, %v439
    %v701 = vunpack.c.l.b16 %v167
    %v702 = vunpack.c.h.b16 %v167
    %v703 = vunpack.c.l.b16 %v168
    %v704 = vunpack.c.h.b16 %v168
    %v705 = vunpack.c.l.b16 %v169
    %v706 = vunpack.c.h.b16 %v169
    %v707 = vunpack.c.l.b16 %v170
    %v708 = vunpack.c.h.b16 %v170
    %v709 = vunpack.c.l.b16 %v171
    %v710 = vunpack.c.h.b16 %v171
    %v711 = vunpack.c.l.b16 %v172
    %v712 = vunpack.c.h.b16 %v172
    %v713 = vunpack.c.l.b16 %v173
    %v714 = vunpack.c.h.b16 %v173
    %v715 = vunpack.c.l.b16 %v174
    %v716 = vunpack.c.h.b16 %v174
    %v717 = vunpack.c.l.b16 %v175
    %v718 = vunpack.c.h.b16 %v175
    %v719 = vunpack.c.l.b16 %v176
    %v720 = vunpack.c.h.b16 %v176
    %v721 = vunpack.c.l.b16 %v177
    %v722 = vunpack.c.h.b16 %v177
    %v723 = vunpack.c.l.b16 %v178
    %v724 = vunpack.c.h.b16 %v178
    %v725 = vunpack.c.l.b16 %v179
    %v726 = vunpack.c.h.b16 %v179
    %v727 = vunpack.c.l.b16 %v180
    %v728 = vunpack.c.h.b16 %v180
    %v729 = vunpack.c.l.b16 %v181
    %v730 = vunpack.c.h.b16 %v181
    %v731 = vunpack.c.l.b16 %v182
    %v732 = vunpack.c.h.b16 %v182
    %v733 = vunpack.c.l.b16 %v183
    %v734 = vunpack.c.h.b16 %v183
    %v735 = vunpack.c.l.b16 %v184
    %v736 = vunpack.c.h.b16 %v184
    %v737 = vunpack.c.l.b16 %v185
    %v738 = vunpack.c.h.b16 %v185
    %v739 = vunpack.c.l.b16 %v186
    %v740 = vunpack.c.h.b16 %v186
    %v741 = vunpack.c.l.b16 %v187
    %v742 = vunpack.c.h.b16 %v187
    %v743 = vunpack.c.l.b16 %v188
    %v744 = vunpack.c.h.b16 %v188
    %v745 = vunpack.c.l.b16 %v189
    %v746 = vunpack.c.h.b16 %v189
    %v747 = vunpack.c.l.b16 %v190
    %v748 = vunpack.c.h.b16 %v190
    %v749 = vunpack.c.l.b16 %v191
    %v750 = vunpack.c.h.b16 %v191
    %v751 = vunpack.c.l.b16 %v192
    %v752 = vunpack.c.h.b16 %v192
    %v753 = vunpack.c.l.b16 %v193
    %v754 = vunpack.c.h.b16 %v193
    %v755 = vunpack.c.l.b16 %v194
    %v756 = vunpack.c.h.b16 %v194
    %v757 = vunpack.c.l.b16 %v195
    %v758 = vunpack.c.h.b16 %v195
    %v759 = vunpack.c.l.b16 %v196
    %v760 = vunpack.c.h.b16 %v196
    %v761 = vunpack.c.l.b16 %v197
    %v762 = vunpack.c.h.b16 %v197
    %v763 = vunpack.c.l.b16 %v198
    %v764 = vunpack.c.h.b16 %v198
    %v765 = vunpack.c.l.b16 %v199
    %v766 = vunpack.c.h.b16 %v199
    %v767 = vunpack.c.l.b16 %v200
    %v768 = vunpack.c.h.b16 %v200
    %v769 = vunpack.c.l.b16 %v201
    %v770 = vunpack.c.h.b16 %v201
    %v771 = vunpack.c.l.b16 %v202
    %v772 = vunpack.c.h.b16 %v202
    %v773 = vunpack.c.l.b16 %v203
    %v774 = vunpack.c.h.b16 %v203
    %v775 = vunpack.c.l.b16 %v204
    %v776 = vunpack.c.h.b16 %v204
    %v777 = vunpack.c.l.b16 %v205
    %v778 = vunpack.c.h.b16 %v205
    %v779 = vunpack.c.l.b16 %v206
    %v780 = vunpack.c.h.b16 %v206
    %v781 = vunpack.c.l.b16 %v207
    %v782 = vunpack.c.h.b16 %v207
    %v783 = vunpack.c.l.b16 %v208
    %v784 = vunpack.c.h.b16 %v208
    %v785 = vunpack.c.l.b16 %v209
    %v786 = vunpack.c.h.b16 %v209
    %v787 = vunpack.c.l.b16 %v210
    %v788 = vunpack.c.h.b16 %v210
    %v789 = vunpack.c.l.b16 %v211
    %v790 = vunpack.c.h.b16 %v211
    %v791 = vunpack.c.l.b16 %v212
    %v792 = vunpack.c.h.b16 %v212
    %v793 = vunpack.c.l.b16 %v213
    %v794 = vunpack.c.h.b16 %v213
    %v795 = vunpack.c.l.b16 %v214
    %v796 = vunpack.c.h.b16 %v214
    %v797 = vunpack.c.l.b16 %v215
    %v798 = vunpack.c.h.b16 %v215
    %v799 = vunpack.c.l.b16 %v216
    %v800 = vunpack.c.h.b16 %v216
    %v801 = vunpack.c.l.b16 %v217
    %v802 = vunpack.c.h.b16 %v217
    %v803 = vunpack.c.l.b16 %v218
    %v804 = vunpack.c.h.b16 %v218
    %v805 = vunpack.c.l.b16 %v219
    %v806 = vunpack.c.h.b16 %v219
    %v807 = vunpack.c.l.b16 %v220
    %v808 = vunpack.c.h.b16 %v220
    %v809 = vunpack.c.l.b16 %v221
    %v810 = vunpack.c.h.b16 %v221
    %v811 = vunpack.c.l.b16 %v222
    %v812 = vunpack.c.h.b16 %v222
    %v813 = vunpack.c.l.b16 %v223
    %v814 = vunpack.c.h.b16 %v223
    %v815 = vunpack.c.l.b16 %v224
    %v816 = vunpack.c.h.b16 %v224
    %v817 = vunpack.c.l.b16 %v225
    %v818 = vunpack.c.h.b16 %v225
    %v819 = vunpack.c.l.b16 %v226
    %v820 = vunpack.c.h.b16 %v226
    %v821 = vunpack.c.l.b16 %v227
    %v822 = vunpack.c.h.b16 %v227
    %v823 = vunpack.c.l.b16 %v228
    %v824 = vunpack.c.h.b16 %v228
    %v825 = vunpack.c.l.b16 %v229
    %v826 = vunpack.c.h.b16 %v229
    %v827 = vunpack.c.l.b16 %v230
    %v828 = vunpack.c.h.b16 %v230
    %v829 = vunpack.c.l.b16 %v231
    %v830 = vunpack.c.h.b16 %v231
    %v831 = vunpack.c.l.b16 %v232
    %v832 = vunpack.c.h.b16 %v232
    %v833 = vunpack.c.l.b16 %v233
    %v834 = vunpack.c.h.b16 %v233
    %v835 = vunpack.c.l.b16 %v234
    %v836 = vunpack.c.h.b16 %v234
    %v837 = vunpack.c.l.b16 %v235
    %v838 = vunpack.c.h.b16 %v235
    %v839 = vunpack.c.l.b16 %v236
    %v840 = vunpack.c.h.b16 %v236
    %v841 = vunpack.c.l.b16 %v237
    %v842 = vunpack.c.h.b16 %v237
    %v843 = vunpack.c.l.b16 %v238
    %v844 = vunpack.c.h.b16 %v238
    %v845 = vunpack.c.l.b16 %v239
    %v846 = vunpack.c.h.b16 %v239
    %v847 = vunpack.c.l.b16 %v240
    %v848 = vunpack.c.h.b16 %v240
    %v849 = vunpack.c.l.b16 %v241
    %v850 = vunpack.c.h.b16 %v241
    %v851 = vunpack.c.l.b16 %v242
    %v852 = vunpack.c.h.b16 %v242
    %v853 = vunpack.c.l.b16 %v243
    %v854 = vunpack.c.h.b16 %v243
    %v855 = vunpack.c.l.b16 %v244
    %v856 = vunpack.c.h.b16 %v244
    %v857 = vunpack.c.l.b16 %v245
    %v858 = vunpack.c.h.b16 %v245
    %v859 = vunpack.c.l.b16 %v246
    %v860 = vunpack.c.h.b16 %v246
    %v861 = vunpack.c.l.b16 %v247
    %v862 = vunpack.c.h.b16 %v247
    %v863 = vunpack.c.l.b16 %v248
    %v864 = vunpack.c.h.b16 %v248
    %v865 = vunpack.c.l.b16 %v249
    %v866 = vunpack.c.h.b16 %v249
    %v867 = vunpack.c.l.b16 %v250
    %v868 = vunpack.c.h.b16 %v250
    %v869 = vunpack.c.l.b16 %v251
    %v870 = vunpack.c.h.b16 %v251
    %v871 = vunpack.c.l.b16 %v252
    %v872 = vunpack.c.h.b16 %v252
    %v873 = vunpack.c.l.b16 %v253
    %v874 = vunpack.c.h.b16 %v253
    %v875 = vunpack.c.l.b16 %v254
    %v876 = vunpack.c.h.b16 %v254
    %v877 = vunpack.c.l.b16 %v255
    %v878 = vunpack.c.h.b16 %v255
    %v879 = vunpack.c.l.b16 %v256
    %v880 = vunpack.c.h.b16 %v256
    %v881 = vunpack.c.l.b16 %v257
    %v882 = vunpack.c.h.b16 %v257
    %v883 = vunpack.c.l.b16 %v258
    %v884 = vunpack.c.h.b16 %v258
    %v885 = vunpack.c.l.b16 %v259
    %v886 = vunpack.c.h.b16 %v259
    %v887 = vunpack.c.l.b16 %v260
    %v888 = vunpack.c.h.b16 %v260
    %v889 = vunpack.c.l.b16 %v261
    %v890 = vunpack.c.h.b16 %v261
    %v891 = vunpack.c.l.b16 %v262
    %v892 = vunpack.c.h.b16 %v262
    %v893 = vunpack.c.l.b16 %v263
    %v894 = vunpack.c.h.b16 %v263
    %v895 = vunpack.c.l.b16 %v264
    %v896 = vunpack.c.h.b16 %v264
    %v897 = vunpack.c.l.b16 %v265
    %v898 = vunpack.c.h.b16 %v265
    %v899 = vunpack.c.l.b16 %v266
    %v900 = vunpack.c.h.b16 %v266
    %v901 = vunpack.c.l.b16 %v267
    %v902 = vunpack.c.h.b16 %v267
    %v903 = vunpack.c.l.b16 %v268
    %v904 = vunpack.c.h.b16 %v268
    %v905 = vunpack.c.l.b16 %v269
    %v906 = vunpack.c.h.b16 %v269
    %v907 = vunpack.c.l.b16 %v270
    %v908 = vunpack.c.h.b16 %v270
    %v909 = vunpack.c.l.b16 %v271
    %v910 = vunpack.c.h.b16 %v271
    %v911 = vunpack.c.l.b16 %v272
    %v912 = vunpack.c.h.b16 %v272
    %v913 = vunpack.c.l.b16 %v273
    %v914 = vunpack.c.h.b16 %v273
    %v915 = vunpack.c.l.b16 %v274
    %v916 = vunpack.c.h.b16 %v274
    %v917 = vunpack.c.l.b16 %v275
    %v918 = vunpack.c.h.b16 %v275
    %v919 = vunpack.c.l.b16 %v276
    %v920 = vunpack.c.h.b16 %v276
    %v921 = vunpack.c.l.b16 %v277
    %v922 = vunpack.c.h.b16 %v277
    %v923 = vunpack.c.l.b16 %v278
    %v924 = vunpack.c.h.b16 %v278
    %v925 = vunpack.c.l.b16 %v279
    %v926 = vunpack.c.h.b16 %v279
    %v927 = vunpack.c.l.b16 %v280
    %v928 = vunpack.c.h.b16 %v280
    %v929 = vunpack.c.l.b16 %v281
    %v930 = vunpack.c.h.b16 %v281
    %v931 = vunpack.c.l.b16 %v282
    %v932 = vunpack.c.h.b16 %v282
    %v933 = vunpack.c.l.b16 %v283
    %v934 = vunpack.c.h.b16 %v283
    %v935 = vunpack.c.l.b16 %v284
    %v936 = vunpack.c.h.b16 %v284
    %v937 = vunpack.c.l.b16 %v285
    %v938 = vunpack.c.h.b16 %v285
    %v939 = vunpack.c.l.b16 %v286
    %v940 = vunpack.c.h.b16 %v286
    %v941 = vunpack.c.l.b16 %v287
    %v942 = vunpack.c.h.b16 %v287
    %v943 = vunpack.c.l.b16 %v288
    %v944 = vunpack.c.h.b16 %v288
    %v945 = vunpack.c.l.b16 %v289
    %v946 = vunpack.c.h.b16 %v289
    %v947 = vunpack.c.l.b16 %v290
    %v948 = vunpack.c.h.b16 %v290
    %v949 = vunpack.c.l.b16 %v291
    %v950 = vunpack.c.h.b16 %v291
    %v951 = vunpack.c.l.b16 %v292
    %v952 = vunpack.c.h.b16 %v292
    %v953 = vunpack.c.l.b16 %v293
    %v954 = vunpack.c.h.b16 %v293
    %v955 = vunpack.c.l.b16 %v294
    %v956 = vunpack.c.h.b16 %v294
    %v957 = vunpack.c.l.b16 %v295
    %v958 = vunpack.c.h.b16 %v295
    %v959 = vunpack.c.l.b16 %v296
    %v960 = vunpack.c.h.b16 %v296
    %v961 = vunpack.c.l.b16 %v297
    %v962 = vunpack.c.h.b16 %v297
    %v963 = vunpack.c.l.b16 %v298
    %v964 = vunpack.c.h.b16 %v298
    %v965 = vunpack.c.l.b16 %v299
    %v966 = vunpack.c.h.b16 %v299
    %v967 = vunpack.c.l.b16 %v300
    %v968 = vunpack.c.h.b16 %v300
    %v969 = vunpack.c.l.b16 %v301
    %v970 = vunpack.c.h.b16 %v301
    %v971 = vunpack.c.l.b16 %v302
    %v972 = vunpack.c.h.b16 %v302
    %v973 = vunpack.c.l.b16 %v303
    %v974 = vunpack.c.h.b16 %v303
    %v975 = vunpack.c.l.b16 %v304
    %v976 = vunpack.c.h.b16 %v304
    %v977 = vunpack.c.l.b16 %v305
    %v978 = vunpack.c.h.b16 %v305
    %v979 = vunpack.c.l.b16 %v306
    %v980 = vunpack.c.h.b16 %v306
    %v981 = vunpack.c.l.b16 %v307
    %v982 = vunpack.c.h.b16 %v307
    %v983 = vunpack.c.l.b16 %v308
    %v984 = vunpack.c.h.b16 %v308
    %v985 = vunpack.c.l.b16 %v309
    %v986 = vunpack.c.h.b16 %v309
    %v987 = vunpack.c.l.b16 %v310
    %v988 = vunpack.c.h.b16 %v310
    %v989 = vunpack.c.l.b16 %v311
    %v990 = vunpack.c.h.b16 %v311
    %v991 = vunpack.c.l.b16 %v312
    %v992 = vunpack.c.h.b16 %v312
    %v993 = vunpack.c.l.b16 %v313
    %v994 = vunpack.c.h.b16 %v313
    %v995 = vunpack.c.l.b16 %v314
    %v996 = vunpack.c.h.b16 %v314
    %v997 = vunpack.c.l.b16 %v315
    %v998 = vunpack.c.h.b16 %v315
    %v999 = vunpack.c.l.b16 %v316
    %v1000 = vunpack.c.h.b16 %v316
    %v1001 = vunpack.c.l.b16 %v317
    %v1002 = vunpack.c.h.b16 %v317
    %v1003 = vunpack.c.l.b16 %v318
    %v1004 = vunpack.c.h.b16 %v318
    %v1005 = vunpack.c.l.b16 %v319
    %v1006 = vunpack.c.h.b16 %v319
    %v1007 = vunpack.c.l.b16 %v320
    %v1008 = vunpack.c.h.b16 %v320
    %v1009 = vunpack.c.l.b16 %v321
    %v1010 = vunpack.c.h.b16 %v321
    %v1011 = vunpack.c.l.b16 %v322
    %v1012 = vunpack.c.h.b16 %v322
    %v1013 = vunpack.c.l.b16 %v323
    %v1014 = vunpack.c.h.b16 %v323
    %v1015 = vunpack.c.l.b16 %v324
    %v1016 = vunpack.c.h.b16 %v324
    %v1017 = vunpack.c.l.b16 %v325
    %v1018 = vunpack.c.h.b16 %v325
    %v1019 = vunpack.c.l.b16 %v326
    %v1020 = vunpack.c.h.b16 %v326
    %v1021 = vunpack.c.l.b16 %v327
    %v1022 = vunpack.c.h.b16 %v327
    %v1023 = vunpack.c.l.b16 %v328
    %v1024 = vunpack.c.h.b16 %v328
    %v1025 = vunpack.c.l.b16 %v329
    %v1026 = vunpack.c.h.b16 %v329
    %v1027 = vunpack.c.l.b16 %v330
    %v1028 = vunpack.c.h.b16 %v330
    %v1029 = vunpack.c.l.b16 %v331
    %v1030 = vunpack.c.h.b16 %v331
    %v1031 = vunpack.c.l.b16 %v332
    %v1032 = vunpack.c.h.b16 %v332
    %v1033 = vunpack.c.l.b16 %v333
    %v1034 = vunpack.c.h.b16 %v333
    %v1035 = vunpack.c.l.b16 %v334
    %v1036 = vunpack.c.h.b16 %v334
    %v1037 = vunpack.c.l.b16 %v335
    %v1038 = vunpack.c.h.b16 %v335
    %v1039 = vunpack.c.l.b16 %v336
    %v1040 = vunpack.c.h.b16 %v336
    %v1041 = vunpack.c.l.b16 %v337
    %v1042 = vunpack.c.h.b16 %v337
    %v1043 = vunpack.c.l.b16 %v338
    %v1044 = vunpack.c.h.b16 %v338
    %v1045 = vunpack.c.l.b16 %v339
    %v1046 = vunpack.c.h.b16 %v339
    %v1047 = vunpack.c.l.b16 %v340
    %v1048 = vunpack.c.h.b16 %v340
    %v1049 = vunpack.c.l.b16 %v341
    %v1050 = vunpack.c.h.b16 %v341
    %v1051 = vunpack.c.l.b16 %v342
    %v1052 = vunpack.c.h.b16 %v342
    %v1053 = vunpack.c.l.b16 %v343
    %v1054 = vunpack.c.h.b16 %v343
    %v1055 = vunpack.c.l.b16 %v344
    %v1056 = vunpack.c.h.b16 %v344
    %v1057 = vunpack.c.l.b16 %v345
    %v1058 = vunpack.c.h.b16 %v345
    %v1059 = vunpack.c.l.b16 %v346
    %v1060 = vunpack.c.h.b16 %v346
    %v1061 = vunpack.c.l.b16 %v347
    %v1062 = vunpack.c.h.b16 %v347
    %v1063 = vunpack.c.l.b16 %v348
    %v1064 = vunpack.c.h.b16 %v348
    %v1065 = vunpack.c.l.b16 %v349
    %v1066 = vunpack.c.h.b16 %v349
    %v1067 = vunpack.c.l.b16 %v350
    %v1068 = vunpack.c.h.b16 %v350
    %v1069 = vunpack.c.l.b16 %v351
    %v1070 = vunpack.c.h.b16 %v351
    %v1071 = vunpack.c.l.b16 %v352
    %v1072 = vunpack.c.h.b16 %v352
    %v1073 = vunpack.c.l.b16 %v353
    %v1074 = vunpack.c.h.b16 %v353
    %v1075 = vunpack.c.l.b16 %v354
    %v1076 = vunpack.c.h.b16 %v354
    %v1077 = vunpack.c.l.b16 %v355
    %v1078 = vunpack.c.h.b16 %v355
    %v1079 = vunpack.c.l.b16 %v356
    %v1080 = vunpack.c.h.b16 %v356
    %v1081 = vunpack.c.l.b16 %v357
    %v1082 = vunpack.c.h.b16 %v357
    %v1083 = vunpack.c.l.b16 %v358
    %v1084 = vunpack.c.h.b16 %v358
    %v1085 = vunpack.c.l.b16 %v359
    %v1086 = vunpack.c.h.b16 %v359
    %v1087 = vunpack.c.l.b16 %v360
    %v1088 = vunpack.c.h.b16 %v360
    %v1089 = vunpack.c.l.b16 %v361
    %v1090 = vunpack.c.h.b16 %v361
    %v1091 = vunpack.c.l.b16 %v362
    %v1092 = vunpack.c.h.b16 %v362
    %v1093 = vunpack.c.l.b16 %v363
    %v1094 = vunpack.c.h.b16 %v363
    %v1095 = vunpack.c.l.b16 %v364
    %v1096 = vunpack.c.h.b16 %v364
    %v1097 = vunpack.c.l.b16 %v365
    %v1098 = vunpack.c.h.b16 %v365
    %v1099 = vunpack.c.l.b16 %v366
    %v1100 = vunpack.c.h.b16 %v366
    %v1101 = vunpack.c.l.b16 %v367
    %v1102 = vunpack.c.h.b16 %v367
    %v1103 = vunpack.c.l.b16 %v368
    %v1104 = vunpack.c.h.b16 %v368
    %v1105 = vunpack.c.l.b16 %v369
    %v1106 = vunpack.c.h.b16 %v369
    %v1107 = vunpack.c.l.b16 %v370
    %v1108 = vunpack.c.h.b16 %v370
    %v1109 = vunpack.c.l.b16 %v371
    %v1110 = vunpack.c.h.b16 %v371
    %v1111 = vunpack.c.l.b16 %v372
    %v1112 = vunpack.c.h.b16 %v372
    %v1113 = vunpack.c.l.b16 %v373
    %v1114 = vunpack.c.h.b16 %v373
    %v1115 = vunpack.c.l.b16 %v374
    %v1116 = vunpack.c.h.b16 %v374
    %v1117 = vunpack.c.l.b16 %v375
    %v1118 = vunpack.c.h.b16 %v375
    %v1119 = vunpack.c.l.b16 %v376
    %v1120 = vunpack.c.h.b16 %v376
    %v1121 = vunpack.c.l.b16 %v377
    %v1122 = vunpack.c.h.b16 %v377
    %v1123 = vunpack.c.l.b16 %v378
    %v1124 = vunpack.c.h.b16 %v378
    %v1125 = vunpack.c.l.b16 %v379
    %v1126 = vunpack.c.h.b16 %v379
    %v1127 = vunpack.c.l.b16 %v380
    %v1128 = vunpack.c.h.b16 %v380
    %v1129 = vunpack.c.l.b16 %v381
    %v1130 = vunpack.c.h.b16 %v381
    %v1131 = vunpack.c.l.b16 %v382
    %v1132 = vunpack.c.h.b16 %v382
    %v1133 = vunpack.c.l.b16 %v383
    %v1134 = vunpack.c.h.b16 %v383
    %v1135 = vunpack.c.l.b16 %v384
    %v1136 = vunpack.c.h.b16 %v384
    %v1137 = vunpack.c.l.b16 %v385
    %v1138 = vunpack.c.h.b16 %v385
    %v1139 = vunpack.c.l.b16 %v386
    %v1140 = vunpack.c.h.b16 %v386
    %v1141 = vunpack.c.l.b16 %v387
    %v1142 = vunpack.c.h.b16 %v387
    %v1143 = vunpack.c.l.b16 %v388
    %v1144 = vunpack.c.h.b16 %v388
    %v1145 = vunpack.c.l.b16 %v389
    %v1146 = vunpack.c.h.b16 %v389
    %v1147 = vunpack.c.l.b16 %v390
    %v1148 = vunpack.c.h.b16 %v390
    %v1149 = vunpack.c.l.b16 %v391
    %v1150 = vunpack.c.h.b16 %v391
    %v1151 = vunpack.c.l.b16 %v392
    %v1152 = vunpack.c.h.b16 %v392
    %v1153 = vunpack.c.l.b16 %v393
    %v1154 = vunpack.c.h.b16 %v393
    %v1155 = vunpack.c.l.b16 %v394
    %v1156 = vunpack.c.h.b16 %v394
    %v1157 = vunpack.c.l.b16 %v395
    %v1158 = vunpack.c.h.b16 %v395
    %v1159 = vunpack.c.l.b16 %v396
    %v1160 = vunpack.c.h.b16 %v396
    %v1161 = vunpack.c.l.b16 %v397
    %v1162 = vunpack.c.h.b16 %v397
    %v1163 = vunpack.c.l.b16 %v398
    %v1164 = vunpack.c.h.b16 %v398
    %v1165 = vunpack.c.l.b16 %v399
    %v1166 = vunpack.c.h.b16 %v399
    %v1167 = vunpack.c.l.b16 %v400
    %v1168 = vunpack.c.h.b16 %v400
    %v1169 = vunpack.c.l.b16 %v401
    %v1170 = vunpack.c.h.b16 %v401
    %v1171 = vunpack.c.l.b16 %v402
    %v1172 = vunpack.c.h.b16 %v402
    %v1173 = vunpack.c.l.b16 %v403
    %v1174 = vunpack.c.h.b16 %v403
    %v1175 = vunpack.c.l.b16 %v404
    %v1176 = vunpack.c.h.b16 %v404
    %v1177 = vunpack.c.l.b16 %v405
    %v1178 = vunpack.c.h.b16 %v405
    %v1179 = vunpack.c.l.b16 %v406
    %v1180 = vunpack.c.h.b16 %v406
    %v1181 = vunpack.c.l.b16 %v407
    %v1182 = vunpack.c.h.b16 %v407
    %v1183 = vunpack.c.l.b16 %v408
    %v1184 = vunpack.c.h.b16 %v408
    %v1185 = vunpack.c.l.b16 %v409
    %v1186 = vunpack.c.h.b16 %v409
    %v1187 = vunpack.c.l.b16 %v410
    %v1188 = vunpack.c.h.b16 %v410
    %v1189 = vunpack.c.l.b16 %v411
    %v1190 = vunpack.c.h.b16 %v411
    %v1191 = vunpack.c.l.b16 %v412
    %v1192 = vunpack.c.h.b16 %v412
    %v1193 = vunpack.c.l.b16 %v413
    %v1194 = vunpack.c.h.b16 %v413
    %v1195 = vunpack.c.l.b16 %v414
    %v1196 = vunpack.c.h.b16 %v414
    %v1197 = vunpack.c.l.b16 %v415
    %v1198 = vunpack.c.h.b16 %v415
    %v1199 = vunpack.c.l.b16 %v416
    %v1200 = vunpack.c.h.b16 %v416
    %v1201 = vunpack.c.l.b16 %v417
    %v1202 = vunpack.c.h.b16 %v417
    %v1203 = vunpack.c.l.b16 %v418
    %v1204 = vunpack.c.h.b16 %v418
    %v1205 = vunpack.c.l.b16 %v419
    %v1206 = vunpack.c.h.b16 %v419
    %v1207 = vunpack.c.l.b16 %v420
    %v1208 = vunpack.c.h.b16 %v420
    %v1209 = vunpack.c.l.b16 %v421
    %v1210 = vunpack.c.h.b16 %v421
    %v1211 = vunpack.c.l.b16 %v422
    %v1212 = vunpack.c.h.b16 %v422
    %v1213 = vpack.c.b16 %v705, %v701
    %v1214 = vpack.c.b16 %v706, %v702
    %v1215 = vpack.c.b16 %v707, %v703
    %v1216 = vpack.c.b16 %v708, %v704
    %v1217 = vpack.c.b16 %v713, %v709
    %v1218 = vpack.c.b16 %v714, %v710
    %v1219 = vpack.c.b16 %v715, %v711
    %v1220 = vpack.c.b16 %v716, %v712
    %v1221 = vpack.c.b16 %v721, %v717
    %v1222 = vpack.c.b16 %v722, %v718
    %v1223 = vpack.c.b16 %v723, %v719
    %v1224 = vpack.c.b16 %v724, %v720
    %v1225 = vpack.c.b16 %v729, %v725
    %v1226 = vpack.c.b16 %v730, %v726
    %v1227 = vpack.c.b16 %v731, %v727
    %v1228 = vpack.c.b16 %v732, %v728
    %v1229 = vpack.c.b16 %v737, %v733
    %v1230 = vpack.c.b16 %v738, %v734
    %v1231 = vpack.c.b16 %v739, %v735
    %v1232 = vpack.c.b16 %v740, %v736
    %v1233 = vpack.c.b16 %v745, %v741
    %v1234 = vpack.c.b16 %v746, %v742
    %v1235 = vpack.c.b16 %v747, %v743
    %v1236 = vpack.c.b16 %v748, %v744
    %v1237 = vpack.c.b16 %v753, %v749
    %v1238 = vpack.c.b16 %v754, %v750
    %v1239 = vpack.c.b16 %v755, %v751
    %v1240 = vpack.c.b16 %v756, %v752
    %v1241 = vpack.c.b16 %v761, %v757
    %v1242 = vpack.c.b16 %v762, %v758
    %v1243 = vpack.c.b16 %v763, %v759
    %v1244 = vpack.c.b16 %v764, %v760
    %v1245 = vpack.c.b16 %v769, %v765
    %v1246 = vpack.c.b16 %v770, %v766
    %v1247 = vpack.c.b16 %v771, %v767
    %v1248 = vpack.c.b16 %v772, %v768
    %v1249 = vpack.c.b16 %v777, %v773
    %v1250 = vpack.c.b16 %v778, %v774
    %v1251 = vpack.c.b16 %v779, %v775
    %v1252 = vpack.c.b16 %v780, %v776
    %v1253 = vpack.c.b16 %v785, %v781
    %v1254 = vpack.c.b16 %v786, %v782
    %v1255 = vpack.c.b16 %v787, %v783
    %v1256 = vpack.c.b16 %v788, %v784
    %v1257 = vpack.c.b16 %v793, %v789
    %v1258 = vpack.c.b16 %v794, %v790
    %v1259 = vpack.c.b16 %v795, %v791
    %v1260 = vpack.c.b16 %v796, %v792
    %v1261 = vpack.c.b16 %v801, %v797
    %v1262 = vpack.c.b16 %v802, %v798
    %v1263 = vpack.c.b16 %v803, %v799
    %v1264 = vpack.c.b16 %v804, %v800
    %v1265 = vpack.c.b16 %v809, %v805
    %v1266 = vpack.c.b16 %v810, %v806
    %v1267 = vpack.c.b16 %v811, %v807
    %v1268 = vpack.c.b16 %v812, %v808
    %v1269 = vpack.c.b16 %v817, %v813
    %v1270 = vpack.c.b16 %v818, %v814
    %v1271 = vpack.c.b16 %v819, %v815
    %v1272 = vpack.c.b16 %v820, %v816
    %v1273 = vpack.c.b16 %v825, %v821
    %v1274 = vpack.c.b16 %v826, %v822
    %v1275 = vpack.c.b16 %v827, %v823
    %v1276 = vpack.c.b16 %v828, %v824
    %v1277 = vpack.c.b16 %v833, %v829
    %v1278 = vpack.c.b16 %v834, %v830
    %v1279 = vpack.c.b16 %v835, %v831
    %v1280 = vpack.c.b16 %v836, %v832
    %v1281 = vpack.c.b16 %v841, %v837
    %v1282 = vpack.c.b16 %v842, %v838
    %v1283 = vpack.c.b16 %v843, %v839
    %v1284 = vpack.c.b16 %v844, %v840
    %v1285 = vpack.c.b16 %v849, %v845
    %v1286 = vpack.c.b16 %v850, %v846
    %v1287 = vpack.c.b16 %v851, %v847
    %v1288 = vpack.c.b16 %v852, %v848
    %v1289 = vpack.c.b16 %v857, %v853
    %v1290 = vpack.c.b16 %v858, %v854
    %v1291 = vpack.c.b16 %v859, %v855
    %v1292 = vpack.c.b16 %v860, %v856
    %v1293 = vpack.c.b16 %v865, %v861
    %v1294 = vpack.c.b16 %v866, %v862
    %v1295 = vpack.c.b16 %v867, %v863
    %v1296 = vpack.c.b16 %v868, %v864
    %v1297 = vpack.c.b16 %v873, %v869
    %v1298 = vpack.c.b16 %v874, %v870
    %v1299 = vpack.c.b16 %v875, %v871
    %v1300 = vpack.c.b16 %v876, %v872
    %v1301 = vpack.c.b16 %v881, %v877
    %v1302 = vpack.c.b16 %v882, %v878
    %v1303 = vpack.c.b16 %v883, %v879
    %v1304 = vpack.c.b16 %v884, %v880
    %v1305 = vpack.c.b16 %v889, %v885
    %v1306 = vpack.c.b16 %v890, %v886
    %v1307 = vpack.c.b16 %v891, %v887
    %v1308 = vpack.c.b16 %v892, %v888
    %v1309 = vpack.c.b16 %v897, %v893
    %v1310 = vpack.c.b16 %v898, %v894
    %v1311 = vpack.c.b16 %v899, %v895
    %v1312 = vpack.c.b16 %v900, %v896
    %v1313 = vpack.c.b16 %v905, %v901
    %v1314 = vpack.c.b16 %v906, %v902
    %v1315 = vpack.c.b16 %v907, %v903
    %v1316 = vpack.c.b16 %v908, %v904
    %v1317 = vpack.c.b16 %v913, %v909
    %v1318 = vpack.c.b16 %v914, %v910
    %v1319 = vpack.c.b16 %v915, %v911
    %v1320 = vpack.c.b16 %v916, %v912
    %v1321 = vpack.c.b16 %v921, %v917
    %v1322 = vpack.c.b16 %v922, %v918
    %v1323 = vpack.c.b16 %v923, %v919
    %v1324 = vpack.c.b16 %v924, %v920
    %v1325 = vpack.c.b16 %v929, %v925
    %v1326 = vpack.c.b16 %v930, %v926
    %v1327 = vpack.c.b16 %v931, %v927
    %v1328 = vpack.c.b16 %v932, %v928
    %v1329 = vpack.c.b16 %v937, %v933
    %v1330 = vpack.c.b16 %v938, %v934
    %v1331 = vpack.c.b16 %v939, %v935
    %v1332 = vpack.c.b16 %v940, %v936
    %v1333 = vpack.c.b16 %v945, %v941
    %v1334 = vpack.c.b16 %v946, %v942
    %v1335 = vpack.c.b16 %v947, %v943
    %v1336 = vpack.c.b16 %v948, %v944
    %v1337 = vpack.c.b16 %v953, %v949
    %v1338 = vpack.c.b16 %v954, %v950
    %v1339 = vpack.c.b16 %v955, %v951
    %v1340 = vpack.c.b16 %v956, %v952
    %v1341 = vpack.c.b16 %v961, %v957
    %v1342 = vpack.c.b16 %v962, %v958
    %v1343 = vpack.c.b16 %v963, %v959
    %v1344 = vpack.c.b16 %v964, %v960
    %v1345 = vpack.c.b16 %v969, %v965
    %v1346 = vpack.c.b16 %v970, %v966
    %v1347 = vpack.c.b16 %v971, %v967
    %v1348 = vpack.c.b16 %v972, %v968
    %v1349 = vpack.c.b16 %v977, %v973
    %v1350 = vpack.c.b16 %v978, %v974
    %v1351 = vpack.c.b16 %v979, %v975
    %v1352 = vpack.c.b16 %v980, %v976
    %v1353 = vpack.c.b16 %v985, %v981
    %v1354 = vpack.c.b16 %v986, %v982
    %v1355 = vpack.c.b16 %v987, %v983
    %v1356 = vpack.c.b16 %v988, %v984
    %v1357 = vpack.c.b16 %v993, %v989
    %v1358 = vpack.c.b16 %v994, %v990
    %v1359 = vpack.c.b16 %v995, %v991
    %v1360 = vpack.c.b16 %v996, %v992
    %v1361 = vpack.c.b16 %v1001, %v997
    %v1362 = vpack.c.b16 %v1002, %v998
    %v1363 = vpack.c.b16 %v1003, %v999
    %v1364 = vpack.c.b16 %v1004, %v1000
    %v1365 = vpack.c.b16 %v1009, %v1005
    %v1366 = vpack.c.b16 %v1010, %v1006
    %v1367 = vpack.c.b16 %v1011, %v1007
    %v1368 = vpack.c.b16 %v1012, %v1008
    %v1369 = vpack.c.b16 %v1017, %v1013
    %v1370 = vpack.c.b16 %v1018, %v1014
    %v1371 = vpack.c.b16 %v1019, %v1015
    %v1372 = vpack.c.b16 %v1020, %v1016
    %v1373 = vpack.c.b16 %v1025, %v1021
    %v1374 = vpack.c.b16 %v1026, %v1022
    %v1375 = vpack.c.b16 %v1027, %v1023
    %v1376 = vpack.c.b16 %v1028, %v1024
    %v1377 = vpack.c.b16 %v1033, %v1029
    %v1378 = vpack.c.b16 %v1034, %v1030
    %v1379 = vpack.c.b16 %v1035, %v1031
    %v1380 = vpack.c.b16 %v1036, %v1032
    %v1381 = vpack.c.b16 %v1041, %v1037
    %v1382 = vpack.c.b16 %v1042, %v1038
    %v1383 = vpack.c.b16 %v1043, %v1039
    %v1384 = vpack.c.b16 %v1044, %v1040
    %v1385 = vpack.c.b16 %v1049, %v1045
    %v1386 = vpack.c.b16 %v1050, %v1046
    %v1387 = vpack.c.b16 %v1051, %v1047
    %v1388 = vpack.c.b16 %v1052, %v1048
    %v1389 = vpack.c.b16 %v1057, %v1053
    %v1390 = vpack.c.b16 %v1058, %v1054
    %v1391 = vpack.c.b16 %v1059, %v1055
    %v1392 = vpack.c.b16 %v1060, %v1056
    %v1393 = vpack.c.b16 %v1065, %v1061
    %v1394 = vpack.c.b16 %v1066, %v1062
    %v1395 = vpack.c.b16 %v1067, %v1063
    %v1396 = vpack.c.b16 %v1068, %v1064
    %v1397 = vpack.c.b16 %v1073, %v1069
    %v1398 = vpack.c.b16 %v1074, %v1070
    %v1399 = vpack.c.b16 %v1075, %v1071
    %v1400 = vpack.c.b16 %v1076, %v1072
    %v1401 = vpack.c.b16 %v1081, %v1077
    %v1402 = vpack.c.b16 %v1082, %v1078
    %v1403 = vpack.c.b16 %v1083, %v1079
    %v1404 = vpack.c.b16 %v1084, %v1080
    %v1405 = vpack.c.b16 %v1089, %v1085
    %v1406 = vpack.c.b16 %v1090, %v1086
    %v1407 = vpack.c.b16 %v1091, %v1087
    %v1408 = vpack.c.b16 %v1092, %v1088
    %v1409 = vpack.c.b16 %v1097, %v1093
    %v1410 = vpack.c.b16 %v1098, %v1094
    %v1411 = vpack.c.b16 %v1099, %v1095
    %v1412 = vpack.c.b16 %v1100, %v1096
    %v1413 = vpack.c.b16 %v1105, %v1101
    %v1414 = vpack.c.b16 %v1106, %v1102
    %v1415 = vpack.c.b16 %v1107, %v1103
    %v1416 = vpack.c.b16 %v1108, %v1104
    %v1417 = vpack.c.b16 %v1113, %v1109
    %v1418 = vpack.c.b16 %v1114, %v1110
    %v1419 = vpack.c.b16 %v1115, %v1111
    %v1420 = vpack.c.b16 %v1116, %v1112
    %v1421 = vpack.c.b16 %v1121, %v1117
    %v1422 = vpack.c.b16 %v1122, %v1118
    %v1423 = vpack.c.b16 %v1123, %v1119
    %v1424 = vpack.c.b16 %v1124, %v1120
    %v1425 = vpack.c.b16 %v1129, %v1125
    %v1426 = vpack.c.b16 %v1130, %v1126
    %v1427 = vpack.c.b16 %v1131, %v1127
    %v1428 = vpack.c.b16 %v1132, %v1128
    %v1429 = vpack.c.b16 %v1137, %v1133
    %v1430 = vpack.c.b16 %v1138, %v1134
    %v1431 = vpack.c.b16 %v1139, %v1135
    %v1432 = vpack.c.b16 %v1140, %v1136
    %v1433 = vpack.c.b16 %v1145, %v1141
    %v1434 = vpack.c.b16 %v1146, %v1142
    %v1435 = vpack.c.b16 %v1147, %v1143
    %v1436 = vpack.c.b16 %v1148, %v1144
    %v1437 = vpack.c.b16 %v1153, %v1149
    %v1438 = vpack.c.b16 %v1154, %v1150
    %v1439 = vpack.c.b16 %v1155, %v1151
    %v1440 = vpack.c.b16 %v1156, %v1152
    %v1441 = vpack.c.b16 %v1161, %v1157
    %v1442 = vpack.c.b16 %v1162, %v1158
    %v1443 = vpack.c.b16 %v1163, %v1159
    %v1444 = vpack.c.b16 %v1164, %v1160
    %v1445 = vpack.c.b16 %v1169, %v1165
    %v1446 = vpack.c.b16 %v1170, %v1166
    %v1447 = vpack.c.b16 %v1171, %v1167
    %v1448 = vpack.c.b16 %v1172, %v1168
    %v1449 = vpack.c.b16 %v1177, %v1173
    %v1450 = vpack.c.b16 %v1178, %v1174
    %v1451 = vpack.c.b16 %v1179, %v1175
    %v1452 = vpack.c.b16 %v1180, %v1176
    %v1453 = vpack.c.b16 %v1185, %v1181
    %v1454 = vpack.c.b16 %v1186, %v1182
    %v1455 = vpack.c.b16 %v1187, %v1183
    %v1456 = vpack.c.b16 %v1188, %v1184
    %v1457 = vpack.c.b16 %v1193, %v1189
    %v1458 = vpack.c.b16 %v1194, %v1190
    %v1459 = vpack.c.b16 %v1195, %v1191
    %v1460 = vpack.c.b16 %v1196, %v1192
    %v1461 = vpack.c.b16 %v1201, %v1197
    %v1462 = vpack.c.b16 %v1202, %v1198
    %v1463 = vpack.c.b16 %v1203, %v1199
    %v1464 = vpack.c.b16 %v1204, %v1200
    %v1465 = vpack.c.b16 %v1209, %v1205
    %v1466 = vpack.c.b16 %v1210, %v1206
    %v1467 = vpack.c.b16 %v1211, %v1207
    %v1468 = vpack.c.b16 %v1212, %v1208
    %1725 = vmatprep.subr.bf16.mxu0 %v1214
    %1726 = vmatpush1.bf16.msra.mxu0 %v1213
    %1727 = vmatprep.subr.bf16.mxu0 %v1218
    %1728 = vmatpush1.bf16.msra.mxu0 %v1217
    %1729 = vmatprep.subr.bf16.mxu0 %v1222
    %1730 = vmatpush1.bf16.msra.mxu0 %v1221
    %1731 = vmatprep.subr.bf16.mxu0 %v1226
    %1732 = vmatpush1.bf16.msra.mxu0 %v1225
    %1733 = vmatprep.subr.bf16.mxu0 %v1230
    %1734 = vmatpush1.bf16.msra.mxu0 %v1229
    %1735 = vmatprep.subr.bf16.mxu0 %v1234
    %1736 = vmatpush1.bf16.msra.mxu0 %v1233
    %1737 = vmatprep.subr.bf16.mxu0 %v1238
    %1738 = vmatpush1.bf16.msra.mxu0 %v1237
    %1739 = vmatprep.subr.bf16.mxu0 %v1242
    %1740 = vmatpush1.bf16.msra.mxu0 %v1241
    %1741 = vmatprep.subr.bf16.mxu0 %v1246
    %1742 = vmatpush1.bf16.msra.mxu0 %v1245
    %1743 = vmatprep.subr.bf16.mxu0 %v1250
    %1744 = vmatpush1.bf16.msra.mxu0 %v1249
    %1745 = vmatprep.subr.bf16.mxu0 %v1254
    %1746 = vmatpush1.bf16.msra.mxu0 %v1253
    %1747 = vmatprep.subr.bf16.mxu0 %v1258
    %1748 = vmatpush1.bf16.msra.mxu0 %v1257
    %1749 = vmatprep.subr.bf16.mxu0 %v1262
    %1750 = vmatpush1.bf16.msra.mxu0 %v1261
    %1751 = vmatprep.subr.bf16.mxu0 %v1266
    %1752 = vmatpush1.bf16.msra.mxu0 %v1265
    %1753 = vmatprep.subr.bf16.mxu0 %v1270
    %1754 = vmatpush1.bf16.msra.mxu0 %v1269
    %1755 = vmatprep.subr.bf16.mxu0 %v1274
    %1756 = vmatpush1.bf16.msra.mxu0 %v1273
    %1757 = vmatprep.mubr.bf16.mxu0 %v160
    %1758 = vmatmul.mubr.bf16.gmra.mrb[0].mxu0 %v159
    %v1759 = vpop.f32.mrb[0].mxu0
    %v1760 = vadd.f32 %v428, %v1759
    %v1761 = vpop.f32.mrb[0].mxu0
    %v1762 = vadd.f32 %v432, %v1761
    %v1763 = vpop.f32.mrb[0].mxu0
    %v1764 = vpop.f32.mrb[0].mxu0
    %1765 = vdwg.mxu0
    %1766 = vmatprep.subr.bf16.mxu0 %v1278
    %1767 = vmatpush1.bf16.msra.mxu0 %v1277
    %1768 = vmatprep.subr.bf16.mxu0 %v1282
    %1769 = vmatpush1.bf16.msra.mxu0 %v1281
    %1770 = vmatprep.subr.bf16.mxu0 %v1286
    %1771 = vmatpush1.bf16.msra.mxu0 %v1285
    %1772 = vmatprep.subr.bf16.mxu0 %v1290
    %1773 = vmatpush1.bf16.msra.mxu0 %v1289
    %1774 = vmatprep.subr.bf16.mxu0 %v1294
    %1775 = vmatpush1.bf16.msra.mxu0 %v1293
    %1776 = vmatprep.subr.bf16.mxu0 %v1298
    %1777 = vmatpush1.bf16.msra.mxu0 %v1297
    %1778 = vmatprep.subr.bf16.mxu0 %v1302
    %1779 = vmatpush1.bf16.msra.mxu0 %v1301
    %1780 = vmatprep.subr.bf16.mxu0 %v1306
    %1781 = vmatpush1.bf16.msra.mxu0 %v1305
    %1782 = vmatprep.subr.bf16.mxu0 %v1310
    %1783 = vmatpush1.bf16.msra.mxu0 %v1309
    %1784 = vmatprep.subr.bf16.mxu0 %v1314
    %1785 = vmatpush1.bf16.msra.mxu0 %v1313
    %1786 = vmatprep.subr.bf16.mxu0 %v1318
    %1787 = vmatpush1.bf16.msra.mxu0 %v1317
    %1788 = vmatprep.subr.bf16.mxu0 %v1322
    %1789 = vmatpush1.bf16.msra.mxu0 %v1321
    %1790 = vmatprep.subr.bf16.mxu0 %v1326
    %1791 = vmatpush1.bf16.msra.mxu0 %v1325
    %1792 = vmatprep.subr.bf16.mxu0 %v1330
    %1793 = vmatpush1.bf16.msra.mxu0 %v1329
    %1794 = vmatprep.subr.bf16.mxu0 %v1334
    %1795 = vmatpush1.bf16.msra.mxu0 %v1333
    %1796 = vmatprep.subr.bf16.mxu0 %v1338
    %1797 = vmatpush1.bf16.msra.mxu0 %v1337
    %1798 = vmatprep.mubr.bf16.mxu0 %v162
    %1799 = vmatmul.mubr.bf16.gmra.mrb[0].mxu0 %v161
    %v1800 = vpop.f32.mrb[0].mxu0
    %v1801 = vadd.f32 %v1760, %v1800
    %v1802 = vpop.f32.mrb[0].mxu0
    %v1803 = vadd.f32 %v1762, %v1802
    %v1804 = vpop.f32.mrb[0].mxu0
    %v1805 = vpop.f32.mrb[0].mxu0
    %1806 = vdwg.mxu0
    %1807 = vmatprep.subr.bf16.mxu0 %v1342
    %1808 = vmatpush1.bf16.msra.mxu0 %v1341
    %1809 = vmatprep.subr.bf16.mxu0 %v1346
    %1810 = vmatpush1.bf16.msra.mxu0 %v1345
    %1811 = vmatprep.subr.bf16.mxu0 %v1350
    %1812 = vmatpush1.bf16.msra.mxu0 %v1349
    %1813 = vmatprep.subr.bf16.mxu0 %v1354
    %1814 = vmatpush1.bf16.msra.mxu0 %v1353
    %1815 = vmatprep.subr.bf16.mxu0 %v1358
    %1816 = vmatpush1.bf16.msra.mxu0 %v1357
    %1817 = vmatprep.subr.bf16.mxu0 %v1362
    %1818 = vmatpush1.bf16.msra.mxu0 %v1361
    %1819 = vmatprep.subr.bf16.mxu0 %v1366
    %1820 = vmatpush1.bf16.msra.mxu0 %v1365
    %1821 = vmatprep.subr.bf16.mxu0 %v1370
    %1822 = vmatpush1.bf16.msra.mxu0 %v1369
    %1823 = vmatprep.subr.bf16.mxu0 %v1374
    %1824 = vmatpush1.bf16.msra.mxu0 %v1373
    %1825 = vmatprep.subr.bf16.mxu0 %v1378
    %1826 = vmatpush1.bf16.msra.mxu0 %v1377
    %1827 = vmatprep.subr.bf16.mxu0 %v1382
    %1828 = vmatpush1.bf16.msra.mxu0 %v1381
    %1829 = vmatprep.subr.bf16.mxu0 %v1386
    %1830 = vmatpush1.bf16.msra.mxu0 %v1385
    %1831 = vmatprep.subr.bf16.mxu0 %v1390
    %1832 = vmatpush1.bf16.msra.mxu0 %v1389
    %1833 = vmatprep.subr.bf16.mxu0 %v1394
    %1834 = vmatpush1.bf16.msra.mxu0 %v1393
    %1835 = vmatprep.subr.bf16.mxu0 %v1398
    %1836 = vmatpush1.bf16.msra.mxu0 %v1397
    %1837 = vmatprep.subr.bf16.mxu0 %v1402
    %1838 = vmatpush1.bf16.msra.mxu0 %v1401
    %1839 = vmatprep.mubr.bf16.mxu0 %v164
    %1840 = vmatmul.mubr.bf16.gmra.mrb[0].mxu0 %v163
    %v1841 = vpop.f32.mrb[0].mxu0
    %v1842 = vadd.f32 %v1801, %v1841
    %v1843 = vpop.f32.mrb[0].mxu0
    %v1844 = vadd.f32 %v1803, %v1843
    %v1845 = vpop.f32.mrb[0].mxu0
    %v1846 = vpop.f32.mrb[0].mxu0
    %1847 = vdwg.mxu0
    %1848 = vmatprep.subr.bf16.mxu0 %v1406
    %1849 = vmatpush1.bf16.msra.mxu0 %v1405
    %1850 = vmatprep.subr.bf16.mxu0 %v1410
    %1851 = vmatpush1.bf16.msra.mxu0 %v1409
    %1852 = vmatprep.subr.bf16.mxu0 %v1414
    %1853 = vmatpush1.bf16.msra.mxu0 %v1413
    %1854 = vmatprep.subr.bf16.mxu0 %v1418
    %1855 = vmatpush1.bf16.msra.mxu0 %v1417
    %1856 = vmatprep.subr.bf16.mxu0 %v1422
    %1857 = vmatpush1.bf16.msra.mxu0 %v1421
    %1858 = vmatprep.subr.bf16.mxu0 %v1426
    %1859 = vmatpush1.bf16.msra.mxu0 %v1425
    %1860 = vmatprep.subr.bf16.mxu0 %v1430
    %1861 = vmatpush1.bf16.msra.mxu0 %v1429
    %1862 = vmatprep.subr.bf16.mxu0 %v1434
    %1863 = vmatpush1.bf16.msra.mxu0 %v1433
    %1864 = vmatprep.subr.bf16.mxu0 %v1438
    %1865 = vmatpush1.bf16.msra.mxu0 %v1437
    %1866 = vmatprep.subr.bf16.mxu0 %v1442
    %1867 = vmatpush1.bf16.msra.mxu0 %v1441
    %1868 = vmatprep.subr.bf16.mxu0 %v1446
    %1869 = vmatpush1.bf16.msra.mxu0 %v1445
    %1870 = vmatprep.subr.bf16.mxu0 %v1450
    %1871 = vmatpush1.bf16.msra.mxu0 %v1449
    %1872 = vmatprep.subr.bf16.mxu0 %v1454
    %1873 = vmatpush1.bf16.msra.mxu0 %v1453
    %1874 = vmatprep.subr.bf16.mxu0 %v1458
    %1875 = vmatpush1.bf16.msra.mxu0 %v1457
    %1876 = vmatprep.subr.bf16.mxu0 %v1462
    %1877 = vmatpush1.bf16.msra.mxu0 %v1461
    %1878 = vmatprep.subr.bf16.mxu0 %v1466
    %1879 = vmatpush1.bf16.msra.mxu0 %v1465
    %1880 = vmatprep.mubr.bf16.mxu0 %v166
    %1881 = vmatmul.mubr.bf16.gmra.mrb[0].mxu0 %v165
    %v1882 = vpop.f32.mrb[0].mxu0
    %v1883 = vadd.f32 %v1842, %v1882
    %v1884 = vpop.f32.mrb[0].mxu0
    %v1885 = vadd.f32 %v1844, %v1884
    %v1886 = vpop.f32.mrb[0].mxu0
    %v1887 = vpop.f32.mrb[0].mxu0
    %1888 = vdwg.mxu0
    %1889 = vmatprep.subr.bf16.mxu0 %v1216
    %1890 = vmatpush1.bf16.msra.mxu0 %v1215
    %1891 = vmatprep.subr.bf16.mxu0 %v1220
    %1892 = vmatpush1.bf16.msra.mxu0 %v1219
    %1893 = vmatprep.subr.bf16.mxu0 %v1224
    %1894 = vmatpush1.bf16.msra.mxu0 %v1223
    %1895 = vmatprep.subr.bf16.mxu0 %v1228
    %1896 = vmatpush1.bf16.msra.mxu0 %v1227
    %1897 = vmatprep.subr.bf16.mxu0 %v1232
    %1898 = vmatpush1.bf16.msra.mxu0 %v1231
    %1899 = vmatprep.subr.bf16.mxu0 %v1236
    %1900 = vmatpush1.bf16.msra.mxu0 %v1235
    %1901 = vmatprep.subr.bf16.mxu0 %v1240
    %1902 = vmatpush1.bf16.msra.mxu0 %v1239
    %1903 = vmatprep.subr.bf16.mxu0 %v1244
    %1904 = vmatpush1.bf16.msra.mxu0 %v1243
    %1905 = vmatprep.subr.bf16.mxu0 %v1248
    %1906 = vmatpush1.bf16.msra.mxu0 %v1247
    %1907 = vmatprep.subr.bf16.mxu0 %v1252
    %1908 = vmatpush1.bf16.msra.mxu0 %v1251
    %1909 = vmatprep.subr.bf16.mxu0 %v1256
    %1910 = vmatpush1.bf16.msra.mxu0 %v1255
    %1911 = vmatprep.subr.bf16.mxu0 %v1260
    %1912 = vmatpush1.bf16.msra.mxu0 %v1259
    %1913 = vmatprep.subr.bf16.mxu0 %v1264
    %1914 = vmatpush1.bf16.msra.mxu0 %v1263
    %1915 = vmatprep.subr.bf16.mxu0 %v1268
    %1916 = vmatpush1.bf16.msra.mxu0 %v1267
    %1917 = vmatprep.subr.bf16.mxu0 %v1272
    %1918 = vmatpush1.bf16.msra.mxu0 %v1271
    %1919 = vmatprep.subr.bf16.mxu0 %v1276
    %1920 = vmatpush1.bf16.msra.mxu0 %v1275
    %1921 = vmatprep.mubr.bf16.mxu0 %v160
    %1922 = vmatmul.mubr.bf16.gmra.mrb[0].mxu0 %v159
    %v1923 = vpop.f32.mrb[0].mxu0
    %v1924 = vadd.f32 %v436, %v1923
    %v1925 = vpop.f32.mrb[0].mxu0
    %v1926 = vadd.f32 %v440, %v1925
    %v1927 = vpop.f32.mrb[0].mxu0
    %v1928 = vpop.f32.mrb[0].mxu0
    %1929 = vdwg.mxu0
    %1930 = vmatprep.subr.bf16.mxu0 %v1280
    %1931 = vmatpush1.bf16.msra.mxu0 %v1279
    %1932 = vmatprep.subr.bf16.mxu0 %v1284
    %1933 = vmatpush1.bf16.msra.mxu0 %v1283
    %1934 = vmatprep.subr.bf16.mxu0 %v1288
    %1935 = vmatpush1.bf16.msra.mxu0 %v1287
    %1936 = vmatprep.subr.bf16.mxu0 %v1292
    %1937 = vmatpush1.bf16.msra.mxu0 %v1291
    %1938 = vmatprep.subr.bf16.mxu0 %v1296
    %1939 = vmatpush1.bf16.msra.mxu0 %v1295
    %1940 = vmatprep.subr.bf16.mxu0 %v1300
    %1941 = vmatpush1.bf16.msra.mxu0 %v1299
    %1942 = vmatprep.subr.bf16.mxu0 %v1304
    %1943 = vmatpush1.bf16.msra.mxu0 %v1303
    %1944 = vmatprep.subr.bf16.mxu0 %v1308
    %1945 = vmatpush1.bf16.msra.mxu0 %v1307
    %1946 = vmatprep.subr.bf16.mxu0 %v1312
    %1947 = vmatpush1.bf16.msra.mxu0 %v1311
    %1948 = vmatprep.subr.bf16.mxu0 %v1316
    %1949 = vmatpush1.bf16.msra.mxu0 %v1315
    %1950 = vmatprep.subr.bf16.mxu0 %v1320
    %1951 = vmatpush1.bf16.msra.mxu0 %v1319
    %1952 = vmatprep.subr.bf16.mxu0 %v1324
    %1953 = vmatpush1.bf16.msra.mxu0 %v1323
    %1954 = vmatprep.subr.bf16.mxu0 %v1328
    %1955 = vmatpush1.bf16.msra.mxu0 %v1327
    %1956 = vmatprep.subr.bf16.mxu0 %v1332
    %1957 = vmatpush1.bf16.msra.mxu0 %v1331
    %1958 = vmatprep.subr.bf16.mxu0 %v1336
    %1959 = vmatpush1.bf16.msra.mxu0 %v1335
    %1960 = vmatprep.subr.bf16.mxu0 %v1340
    %1961 = vmatpush1.bf16.msra.mxu0 %v1339
    %1962 = vmatprep.mubr.bf16.mxu0 %v162
    %1963 = vmatmul.mubr.bf16.gmra.mrb[0].mxu0 %v161
    %v1964 = vpop.f32.mrb[0].mxu0
    %v1965 = vadd.f32 %v1924, %v1964
    %v1966 = vpop.f32.mrb[0].mxu0
    %v1967 = vadd.f32 %v1926, %v1966
    %v1968 = vpop.f32.mrb[0].mxu0
    %v1969 = vpop.f32.mrb[0].mxu0
    %1970 = vdwg.mxu0
    %1971 = vmatprep.subr.bf16.mxu0 %v1344
    %1972 = vmatpush1.bf16.msra.mxu0 %v1343
    %1973 = vmatprep.subr.bf16.mxu0 %v1348
    %1974 = vmatpush1.bf16.msra.mxu0 %v1347
    %1975 = vmatprep.subr.bf16.mxu0 %v1352
    %1976 = vmatpush1.bf16.msra.mxu0 %v1351
    %1977 = vmatprep.subr.bf16.mxu0 %v1356
    %1978 = vmatpush1.bf16.msra.mxu0 %v1355
    %1979 = vmatprep.subr.bf16.mxu0 %v1360
    %1980 = vmatpush1.bf16.msra.mxu0 %v1359
    %1981 = vmatprep.subr.bf16.mxu0 %v1364
    %1982 = vmatpush1.bf16.msra.mxu0 %v1363
    %1983 = vmatprep.subr.bf16.mxu0 %v1368
    %1984 = vmatpush1.bf16.msra.mxu0 %v1367
    %1985 = vmatprep.subr.bf16.mxu0 %v1372
    %1986 = vmatpush1.bf16.msra.mxu0 %v1371
    %1987 = vmatprep.subr.bf16.mxu0 %v1376
    %1988 = vmatpush1.bf16.msra.mxu0 %v1375
    %1989 = vmatprep.subr.bf16.mxu0 %v1380
    %1990 = vmatpush1.bf16.msra.mxu0 %v1379
    %1991 = vmatprep.subr.bf16.mxu0 %v1384
    %1992 = vmatpush1.bf16.msra.mxu0 %v1383
    %1993 = vmatprep.subr.bf16.mxu0 %v1388
    %1994 = vmatpush1.bf16.msra.mxu0 %v1387
    %1995 = vmatprep.subr.bf16.mxu0 %v1392
    %1996 = vmatpush1.bf16.msra.mxu0 %v1391
    %1997 = vmatprep.subr.bf16.mxu0 %v1396
    %1998 = vmatpush1.bf16.msra.mxu0 %v1395
    %1999 = vmatprep.subr.bf16.mxu0 %v1400
    %2000 = vmatpush1.bf16.msra.mxu0 %v1399
    %2001 = vmatprep.subr.bf16.mxu0 %v1404
    %2002 = vmatpush1.bf16.msra.mxu0 %v1403
    %2003 = vmatprep.mubr.bf16.mxu0 %v164
    %2004 = vmatmul.mubr.bf16.gmra.mrb[0].mxu0 %v163
    %v2005 = vpop.f32.mrb[0].mxu0
    %v2006 = vadd.f32 %v1965, %v2005
    %v2007 = vpop.f32.mrb[0].mxu0
    %v2008 = vadd.f32 %v1967, %v2007
    %v2009 = vpop.f32.mrb[0].mxu0
    %v2010 = vpop.f32.mrb[0].mxu0
    %2011 = vdwg.mxu0
    %2012 = vmatprep.subr.bf16.mxu0 %v1408
    %2013 = vmatpush1.bf16.msra.mxu0 %v1407
    %2014 = vmatprep.subr.bf16.mxu0 %v1412
    %2015 = vmatpush1.bf16.msra.mxu0 %v1411
    %2016 = vmatprep.subr.bf16.mxu0 %v1416
    %2017 = vmatpush1.bf16.msra.mxu0 %v1415
    %2018 = vmatprep.subr.bf16.mxu0 %v1420
    %2019 = vmatpush1.bf16.msra.mxu0 %v1419
    %2020 = vmatprep.subr.bf16.mxu0 %v1424
    %2021 = vmatpush1.bf16.msra.mxu0 %v1423
    %2022 = vmatprep.subr.bf16.mxu0 %v1428
    %2023 = vmatpush1.bf16.msra.mxu0 %v1427
    %2024 = vmatprep.subr.bf16.mxu0 %v1432
    %2025 = vmatpush1.bf16.msra.mxu0 %v1431
    %2026 = vmatprep.subr.bf16.mxu0 %v1436
    %2027 = vmatpush1.bf16.msra.mxu0 %v1435
    %2028 = vmatprep.subr.bf16.mxu0 %v1440
    %2029 = vmatpush1.bf16.msra.mxu0 %v1439
    %2030 = vmatprep.subr.bf16.mxu0 %v1444
    %2031 = vmatpush1.bf16.msra.mxu0 %v1443
    %2032 = vmatprep.subr.bf16.mxu0 %v1448
    %2033 = vmatpush1.bf16.msra.mxu0 %v1447
    %2034 = vmatprep.subr.bf16.mxu0 %v1452
    %2035 = vmatpush1.bf16.msra.mxu0 %v1451
    %2036 = vmatprep.subr.bf16.mxu0 %v1456
    %2037 = vmatpush1.bf16.msra.mxu0 %v1455
    %2038 = vmatprep.subr.bf16.mxu0 %v1460
    %2039 = vmatpush1.bf16.msra.mxu0 %v1459
    %2040 = vmatprep.subr.bf16.mxu0 %v1464
    %2041 = vmatpush1.bf16.msra.mxu0 %v1463
    %2042 = vmatprep.subr.bf16.mxu0 %v1468
    %2043 = vmatpush1.bf16.msra.mxu0 %v1467
    %2044 = vmatprep.mubr.bf16.mxu0 %v166
    %2045 = vmatmul.mubr.bf16.gmra.mrb[0].mxu0 %v165
    %v2046 = vpop.f32.mrb[0].mxu0
    %v2047 = vadd.f32 %v2006, %v2046
    %v2048 = vpop.f32.mrb[0].mxu0
    %v2049 = vadd.f32 %v2008, %v2048
    %v2050 = vpop.f32.mrb[0].mxu0
    %v2051 = vpop.f32.mrb[0].mxu0
    %2052 = vdwg.mxu0
    %v2053 = vmax.f32 %v1883, 0.0
    %v2054 = vmax.f32 %v1885, 0.0
    %v2055 = vmax.f32 %v2047, 0.0
    %v2056 = vmax.f32 %v2049, 0.0
    %v2057 = vpack.c.bf16 %v2053, %v2053
    %v2058 = vpack.c.bf16 %v2054, %v2054
    %v2059 = vpack.c.bf16 %v2055, %v2055
    %v2060 = vpack.c.bf16 %v2056, %v2056
    %v2061 = vld [vmem:[#allocation7] sm:$0xf]
    %v2062 = vld [vmem:[#allocation7 + $0x4] sm:$0xf]
    %v2063 = vld [vmem:[#allocation7 + $0x8] sm:$0xf]
    %v2064 = vld [vmem:[#allocation7 + $0xc] sm:$0xf]
    %v2065 = vld [vmem:[#allocation7 + $0x10] sm:$0xf]
    %v2066 = vld [vmem:[#allocation7 + $0x14] sm:$0xf]
    %v2067 = vld [vmem:[#allocation7 + $0x18] sm:$0xf]
    %v2068 = vld [vmem:[#allocation7 + $0x1c] sm:$0xf]
    %v2069 = vld [vmem:[#allocation7 + $0x20] sm:$0xf]
    %v2070 = vld [vmem:[#allocation7 + $0x24] sm:$0xf]
    %v2071 = vld [vmem:[#allocation7 + $0x28] sm:$0xf]
    %v2072 = vld [vmem:[#allocation7 + $0x2c] sm:$0xf]
    %v2073 = vld [vmem:[#allocation7 + $0x30] sm:$0xf]
    %v2074 = vld [vmem:[#allocation7 + $0x34] sm:$0xf]
    %v2075 = vld [vmem:[#allocation7 + $0x38] sm:$0xf]
    %v2076 = vld [vmem:[#allocation7 + $0x3c] sm:$0xf]
    %v2077 = vld [vmem:[#allocation7 + $0x40] sm:$0xf]
    %v2078 = vld [vmem:[#allocation7 + $0x44] sm:$0xf]
    %v2079 = vld [vmem:[#allocation7 + $0x48] sm:$0xf]
    %v2080 = vld [vmem:[#allocation7 + $0x4c] sm:$0xf]
    %v2081 = vld [vmem:[#allocation7 + $0x50] sm:$0xf]
    %v2082 = vld [vmem:[#allocation7 + $0x54] sm:$0xf]
    %v2083 = vld [vmem:[#allocation7 + $0x58] sm:$0xf]
    %v2084 = vld [vmem:[#allocation7 + $0x5c] sm:$0xf]
    %v2085 = vld [vmem:[#allocation7 + $0x60] sm:$0xf]
    %v2086 = vld [vmem:[#allocation7 + $0x64] sm:$0xf]
    %v2087 = vld [vmem:[#allocation7 + $0x68] sm:$0xf]
    %v2088 = vld [vmem:[#allocation7 + $0x6c] sm:$0xf]
    %v2089 = vld [vmem:[#allocation7 + $0x70] sm:$0xf]
    %v2090 = vld [vmem:[#allocation7 + $0x74] sm:$0xf]
    %v2091 = vld [vmem:[#allocation7 + $0x78] sm:$0xf]
    %v2092 = vld [vmem:[#allocation7 + $0x7c] sm:$0xf]
    %v2093 = vld [vmem:[#allocation7 + $0x80] sm:$0xf]
    %v2094 = vld [vmem:[#allocation7 + $0x84] sm:$0xf]
    %v2095 = vld [vmem:[#allocation7 + $0x88] sm:$0xf]
    %v2096 = vld [vmem:[#allocation7 + $0x8c] sm:$0xf]
    %v2097 = vld [vmem:[#allocation7 + $0x90] sm:$0xf]
    %v2098 = vld [vmem:[#allocation7 + $0x94] sm:$0xf]
    %v2099 = vld [vmem:[#allocation7 + $0x98] sm:$0xf]
    %v2100 = vld [vmem:[#allocation7 + $0x9c] sm:$0xf]
    %v2101 = vld [vmem:[#allocation7 + $0xa0] sm:$0xf]
    %v2102 = vld [vmem:[#allocation7 + $0xa4] sm:$0xf]
    %v2103 = vld [vmem:[#allocation7 + $0xa8] sm:$0xf]
    %v2104 = vld [vmem:[#allocation7 + $0xac] sm:$0xf]
    %v2105 = vld [vmem:[#allocation7 + $0xb0] sm:$0xf]
    %v2106 = vld [vmem:[#allocation7 + $0xb4] sm:$0xf]
    %v2107 = vld [vmem:[#allocation7 + $0xb8] sm:$0xf]
    %v2108 = vld [vmem:[#allocation7 + $0xbc] sm:$0xf]
    %v2109 = vld [vmem:[#allocation7 + $0xc0] sm:$0xf]
    %v2110 = vld [vmem:[#allocation7 + $0xc4] sm:$0xf]
    %v2111 = vld [vmem:[#allocation7 + $0xc8] sm:$0xf]
    %v2112 = vld [vmem:[#allocation7 + $0xcc] sm:$0xf]
    %v2113 = vld [vmem:[#allocation7 + $0xd0] sm:$0xf]
    %v2114 = vld [vmem:[#allocation7 + $0xd4] sm:$0xf]
    %v2115 = vld [vmem:[#allocation7 + $0xd8] sm:$0xf]
    %v2116 = vld [vmem:[#allocation7 + $0xdc] sm:$0xf]
    %v2117 = vld [vmem:[#allocation7 + $0xe0] sm:$0xf]
    %v2118 = vld [vmem:[#allocation7 + $0xe4] sm:$0xf]
    %v2119 = vld [vmem:[#allocation7 + $0xe8] sm:$0xf]
    %v2120 = vld [vmem:[#allocation7 + $0xec] sm:$0xf]
    %v2121 = vld [vmem:[#allocation7 + $0xf0] sm:$0xf]
    %v2122 = vld [vmem:[#allocation7 + $0xf4] sm:$0xf]
    %v2123 = vld [vmem:[#allocation7 + $0xf8] sm:$0xf]
    %v2124 = vld [vmem:[#allocation7 + $0xfc] sm:$0xf]
    %v2125 = vld [vmem:[%s4] sm:$0x1]
    %v2127 = vlaneseq
    %v2128 = vshrl.u32 %v2127, 7
    %v2129 = vsub.s32 0, %v2128
    %v2130 = vrot.slane %v2125, %v2129
    %v2196 = vunpack.c.l.b16 %v2061
    %v2197 = vunpack.c.l.b16 %v2062
    %v2198 = vunpack.c.l.b16 %v2063
    %v2199 = vunpack.c.l.b16 %v2064
    %v2200 = vunpack.c.l.b16 %v2065
    %v2201 = vunpack.c.l.b16 %v2066
    %v2202 = vunpack.c.l.b16 %v2067
    %v2203 = vunpack.c.l.b16 %v2068
    %v2204 = vunpack.c.l.b16 %v2069
    %v2205 = vunpack.c.l.b16 %v2070
    %v2206 = vunpack.c.l.b16 %v2071
    %v2207 = vunpack.c.l.b16 %v2072
    %v2208 = vunpack.c.l.b16 %v2073
    %v2209 = vunpack.c.l.b16 %v2074
    %v2210 = vunpack.c.l.b16 %v2075
    %v2211 = vunpack.c.l.b16 %v2076
    %v2212 = vunpack.c.l.b16 %v2077
    %v2213 = vunpack.c.l.b16 %v2078
    %v2214 = vunpack.c.l.b16 %v2079
    %v2215 = vunpack.c.l.b16 %v2080
    %v2216 = vunpack.c.l.b16 %v2081
    %v2217 = vunpack.c.l.b16 %v2082
    %v2218 = vunpack.c.l.b16 %v2083
    %v2219 = vunpack.c.l.b16 %v2084
    %v2220 = vunpack.c.l.b16 %v2085
    %v2221 = vunpack.c.l.b16 %v2086
    %v2222 = vunpack.c.l.b16 %v2087
    %v2223 = vunpack.c.l.b16 %v2088
    %v2224 = vunpack.c.l.b16 %v2089
    %v2225 = vunpack.c.l.b16 %v2090
    %v2226 = vunpack.c.l.b16 %v2091
    %v2227 = vunpack.c.l.b16 %v2092
    %v2228 = vunpack.c.l.b16 %v2093
    %v2229 = vunpack.c.l.b16 %v2094
    %v2230 = vunpack.c.l.b16 %v2095
    %v2231 = vunpack.c.l.b16 %v2096
    %v2232 = vunpack.c.l.b16 %v2097
    %v2233 = vunpack.c.l.b16 %v2098
    %v2234 = vunpack.c.l.b16 %v2099
    %v2235 = vunpack.c.l.b16 %v2100
    %v2236 = vunpack.c.l.b16 %v2101
    %v2237 = vunpack.c.l.b16 %v2102
    %v2238 = vunpack.c.l.b16 %v2103
    %v2239 = vunpack.c.l.b16 %v2104
    %v2240 = vunpack.c.l.b16 %v2105
    %v2241 = vunpack.c.l.b16 %v2106
    %v2242 = vunpack.c.l.b16 %v2107
    %v2243 = vunpack.c.l.b16 %v2108
    %v2244 = vunpack.c.l.b16 %v2109
    %v2245 = vunpack.c.l.b16 %v2110
    %v2246 = vunpack.c.l.b16 %v2111
    %v2247 = vunpack.c.l.b16 %v2112
    %v2248 = vunpack.c.l.b16 %v2113
    %v2249 = vunpack.c.l.b16 %v2114
    %v2250 = vunpack.c.l.b16 %v2115
    %v2251 = vunpack.c.l.b16 %v2116
    %v2252 = vunpack.c.l.b16 %v2117
    %v2253 = vunpack.c.l.b16 %v2118
    %v2254 = vunpack.c.l.b16 %v2119
    %v2255 = vunpack.c.l.b16 %v2120
    %v2256 = vunpack.c.l.b16 %v2121
    %v2257 = vunpack.c.l.b16 %v2122
    %v2258 = vunpack.c.l.b16 %v2123
    %v2259 = vunpack.c.l.b16 %v2124
    %v2260 = vpack.c.b16 %v2197, %v2196
    %v2261 = vpack.c.b16 %v2199, %v2198
    %v2262 = vpack.c.b16 %v2201, %v2200
    %v2263 = vpack.c.b16 %v2203, %v2202
    %v2264 = vpack.c.b16 %v2205, %v2204
    %v2265 = vpack.c.b16 %v2207, %v2206
    %v2266 = vpack.c.b16 %v2209, %v2208
    %v2267 = vpack.c.b16 %v2211, %v2210
    %v2268 = vpack.c.b16 %v2213, %v2212
    %v2269 = vpack.c.b16 %v2215, %v2214
    %v2270 = vpack.c.b16 %v2217, %v2216
    %v2271 = vpack.c.b16 %v2219, %v2218
    %v2272 = vpack.c.b16 %v2221, %v2220
    %v2273 = vpack.c.b16 %v2223, %v2222
    %v2274 = vpack.c.b16 %v2225, %v2224
    %v2275 = vpack.c.b16 %v2227, %v2226
    %v2276 = vpack.c.b16 %v2229, %v2228
    %v2277 = vpack.c.b16 %v2231, %v2230
    %v2278 = vpack.c.b16 %v2233, %v2232
    %v2279 = vpack.c.b16 %v2235, %v2234
    %v2280 = vpack.c.b16 %v2237, %v2236
    %v2281 = vpack.c.b16 %v2239, %v2238
    %v2282 = vpack.c.b16 %v2241, %v2240
    %v2283 = vpack.c.b16 %v2243, %v2242
    %v2284 = vpack.c.b16 %v2245, %v2244
    %v2285 = vpack.c.b16 %v2247, %v2246
    %v2286 = vpack.c.b16 %v2249, %v2248
    %v2287 = vpack.c.b16 %v2251, %v2250
    %v2288 = vpack.c.b16 %v2253, %v2252
    %v2289 = vpack.c.b16 %v2255, %v2254
    %v2290 = vpack.c.b16 %v2257, %v2256
    %v2291 = vpack.c.b16 %v2259, %v2258
    %2324 = vmatprep.subr.bf16.mxu0 0
    %2325 = vmatpush1.bf16.msra.mxu0 %v2260
    %2326 = vmatprep.subr.bf16.mxu0 0
    %2327 = vmatpush1.bf16.msra.mxu0 %v2261
    %2328 = vmatprep.subr.bf16.mxu0 0
    %2329 = vmatpush1.bf16.msra.mxu0 %v2262
    %2330 = vmatprep.subr.bf16.mxu0 0
    %2331 = vmatpush1.bf16.msra.mxu0 %v2263
    %2332 = vmatprep.subr.bf16.mxu0 0
    %2333 = vmatpush1.bf16.msra.mxu0 %v2264
    %2334 = vmatprep.subr.bf16.mxu0 0
    %2335 = vmatpush1.bf16.msra.mxu0 %v2265
    %2336 = vmatprep.subr.bf16.mxu0 0
    %2337 = vmatpush1.bf16.msra.mxu0 %v2266
    %2338 = vmatprep.subr.bf16.mxu0 0
    %2339 = vmatpush1.bf16.msra.mxu0 %v2267
    %2340 = vmatprep.subr.bf16.mxu0 0
    %2341 = vmatpush1.bf16.msra.mxu0 %v2268
    %2342 = vmatprep.subr.bf16.mxu0 0
    %2343 = vmatpush1.bf16.msra.mxu0 %v2269
    %2344 = vmatprep.subr.bf16.mxu0 0
    %2345 = vmatpush1.bf16.msra.mxu0 %v2270
    %2346 = vmatprep.subr.bf16.mxu0 0
    %2347 = vmatpush1.bf16.msra.mxu0 %v2271
    %2348 = vmatprep.subr.bf16.mxu0 0
    %2349 = vmatpush1.bf16.msra.mxu0 %v2272
    %2350 = vmatprep.subr.bf16.mxu0 0
    %2351 = vmatpush1.bf16.msra.mxu0 %v2273
    %2352 = vmatprep.subr.bf16.mxu0 0
    %2353 = vmatpush1.bf16.msra.mxu0 %v2274
    %2354 = vmatprep.subr.bf16.mxu0 0
    %2355 = vmatpush1.bf16.msra.mxu0 %v2275
    %2356 = vmatprep.mubr.bf16.mxu0 %v2058
    %2357 = vmatmul.mubr.bf16.gmra.mrb[0].mxu0 %v2057
    %v2358 = vpop.f32.mrb[0].mxu0
    %v2359 = vadd.f32 %v2130, %v2358
    %v2360 = vpop.f32.mrb[0].mxu0
    %v2361 = vpop.f32.mrb[0].mxu0
    %v2362 = vpop.f32.mrb[0].mxu0
    %2363 = vdwg.mxu0
    %2364 = vmatprep.subr.bf16.mxu0 0
    %2365 = vmatpush1.bf16.msra.mxu0 %v2276
    %2366 = vmatprep.subr.bf16.mxu0 0
    %2367 = vmatpush1.bf16.msra.mxu0 %v2277
    %2368 = vmatprep.subr.bf16.mxu0 0
    %2369 = vmatpush1.bf16.msra.mxu0 %v2278
    %2370 = vmatprep.subr.bf16.mxu0 0
    %2371 = vmatpush1.bf16.msra.mxu0 %v2279
    %2372 = vmatprep.subr.bf16.mxu0 0
    %2373 = vmatpush1.bf16.msra.mxu0 %v2280
    %2374 = vmatprep.subr.bf16.mxu0 0
    %2375 = vmatpush1.bf16.msra.mxu0 %v2281
    %2376 = vmatprep.subr.bf16.mxu0 0
    %2377 = vmatpush1.bf16.msra.mxu0 %v2282
    %2378 = vmatprep.subr.bf16.mxu0 0
    %2379 = vmatpush1.bf16.msra.mxu0 %v2283
    %2380 = vmatprep.subr.bf16.mxu0 0
    %2381 = vmatpush1.bf16.msra.mxu0 %v2284
    %2382 = vmatprep.subr.bf16.mxu0 0
    %2383 = vmatpush1.bf16.msra.mxu0 %v2285
    %2384 = vmatprep.subr.bf16.mxu0 0
    %2385 = vmatpush1.bf16.msra.mxu0 %v2286
    %2386 = vmatprep.subr.bf16.mxu0 0
    %2387 = vmatpush1.bf16.msra.mxu0 %v2287
    %2388 = vmatprep.subr.bf16.mxu0 0
    %2389 = vmatpush1.bf16.msra.mxu0 %v2288
    %2390 = vmatprep.subr.bf16.mxu0 0
    %2391 = vmatpush1.bf16.msra.mxu0 %v2289
    %2392 = vmatprep.subr.bf16.mxu0 0
    %2393 = vmatpush1.bf16.msra.mxu0 %v2290
    %2394 = vmatprep.subr.bf16.mxu0 0
    %2395 = vmatpush1.bf16.msra.mxu0 %v2291
    %2396 = vmatprep.mubr.bf16.mxu0 %v2060
    %2397 = vmatmul.mubr.bf16.gmra.mrb[0].mxu0 %v2059
    %v2398 = vpop.f32.mrb[0].mxu0
    %v2399 = vadd.f32 %v2359, %v2398
    %v2400 = vpop.f32.mrb[0].mxu0
    %v2401 = vpop.f32.mrb[0].mxu0
    %v2402 = vpop.f32.mrb[0].mxu0
    %2403 = vdwg.mxu0
    %v2404 = vlaneseq
    %v2405 = vand.u32 %v2404, 127
    %v2406 = vmul.f32 %v2399, 0.5
    %v2407 = vmul.f32 %v2406, 1.442695
    %v2408 = vpow.pop %v2407
    %v2409 = vadd.f32 %v2408, 1e-06
    %vm2410 = vcmp.lt.s32.totalorder %v2405, 16
    %v2411 = vsel %vm2410, %v2399, %v2409
    %2412 = vst [vmem:[#allocation8] sm:$0xff] %v2411
    // Predicated region
    $region34: #{tpu_custom_call.1} parent=1 // pred_check
      _
    $region35: #{tpu_custom_call.1} parent=1 // pred_check_branch
      %2414 = sbr.rel (0) target = $region37
    $region36: #{tpu_custom_call.1} parent=1 // pred_region
      %s2416 = ssub.s32 128, 32
      %2417 = vsyncadd [#allocation4], %s2416
      %s2418 = sshll.u32 [#allocation8], 4
      %s2419 = int_to_ptr.vmem [resolvable:$true] %s2418
      %2424 = dma.vmem_to_hbm [thread:$0]  %s2419, 32, %s5, [#allocation4], 32, 32, 2
    $region37: #{tpu_custom_call.1} parent=1 // pred_fallthru
      _
    // Predicated region
    $region38: #{tpu_custom_call.1} parent=1 // pred_check
      _
    $region39: #{tpu_custom_call.1} parent=1 // pred_check_branch
      %2426 = sbr.rel (0) target = $region41
    $region40: #{tpu_custom_call.1} parent=1 // pred_region
      %2427 = dma.done [#allocation4], 128
    $region41: #{tpu_custom_call.1} parent=1 // pred_fallthru
      _
    %2428 = vsyncpa [#allocation3], 1
    %2429 = vsyncpa [#allocation6], 1
    %2430 = vsyncpa [#allocation4], 1

</llo_original>
